<compile_context>
chip_gen: v6e
topology: v6e:2x2x1
jax: 0.10.0
libtpu: 0.0.40
codegen_flags: <defaults>
</compile_context>

<pallas_src>
import functools
import math

import jax
import jax.numpy as jnp
from jax.experimental import pallas as pl
from jax.experimental.pallas import tpu as pltpu


def _action_decoder_kernel(s_valid, sem_ref, wkq_ref, bkq_ref, wv_ref, bv_ref,
                           e2_ref, rmat_ref, wc_ref, bc_ref, out_ref):
    bt, sp, hid = sem_ref.shape          # batch tile, padded sequence, hidden
    two_nh = wkq_ref.shape[1]            # 2 * num_heads (verb heads | noun heads)
    cdt = sem_ref.dtype                  # compute dtype for MXU operands
    approx = sem_ref.dtype != jnp.float32

    # Layout-free flatten: sp is padded to a multiple of 8 in the wrapper.
    x = sem_ref[...].reshape(bt * sp, hid)

    # Attention scores for ALL 2*nh pseudo-queries in ONE matmul.
    # Wk and the pre-scaled block-diagonal query matrix are folded on the host:
    #   scores = (x Wk^T + bk) qmat = x (Wk^T qmat) + bk qmat.
    scores = jnp.dot(x, wkq_ref[...],
                     preferred_element_type=jnp.float32) + bkq_ref[...]   # [bt*sp, 2nh]
    scores = scores.reshape(bt, sp, two_nh)
    if s_valid < sp:                      # static: mask zero-padded key positions
        pos = jax.lax.broadcasted_iota(jnp.int32, (1, sp, 1), 1)
        scores = jnp.where(pos < s_valid, scores, jnp.float32(-1e30))

    # Shared V projection (used by both the verb and the noun branch).
    v = jnp.dot(x, wv_ref[...],
                preferred_element_type=jnp.float32) + bv_ref[...]         # [bt*sp, H]

    # Softmax over the key axis for the whole batch tile at once.
    m = jnp.max(scores, axis=1, keepdims=True)
    p = jnp.exp(scores - m)
    denom = jnp.sum(p, axis=1, keepdims=True)
    p = p * pl.reciprocal(denom, approx=approx)                           # [bt, sp, 2nh]

    # Expand per-head probabilities across head_dim lanes for verb & noun together
    # (block-diagonal 0/1 expansion matrix) -> [bt*sp, 2H].
    p2 = jnp.dot(p.reshape(bt * sp, two_nh).astype(cdt), e2_ref[...],
                 preferred_element_type=jnp.float32)

    # Weight V (shared between branches) and reduce over the sequence per batch row
    # with a single 0/1 block-summation matmul -> [bt, 2H] = [attn_verb | attn_noun].
    weighted = (p2 * jnp.concatenate([v, v], axis=1)).astype(cdt)
    attn = jnp.dot(rmat_ref[...], weighted, preferred_element_type=jnp.float32)

    # Fused out_proj + verb/noun classifiers (block-diagonal, lane-dense padded).
    logits = jnp.dot(attn.astype(cdt), wc_ref[...],
                     preferred_element_type=jnp.float32) + bc_ref[...]
    out_ref[...] = logits.astype(out_ref.dtype)


@functools.partial(jax.jit, static_argnames=("num_heads", "batch_tile",
                                             "compute_dtype", "single_buffer_weights"))
def action_decoder_forward(semantic_feat, params, *, num_heads=8, batch_tile=None,
                           compute_dtype=jnp.bfloat16, single_buffer_weights=True):
    """semantic_feat: [B, S, H].  Returns (verb_logits [B, Cv], noun_logits [B, Cn])."""
    B, S, H = semantic_feat.shape
    assert H % num_heads == 0, "hidden_dim must be divisible by num_heads"
    D = H // num_heads
    scale = 1.0 / math.sqrt(D)
    cdt = jnp.dtype(compute_dtype)
    f32 = jnp.float32

    # Pad the sequence so the in-kernel [bt, S, H] -> [bt*S, H] flatten is layout-free.
    Sp = -(-S // 8) * 8
    if Sp != S:
        semantic_feat = jnp.pad(semantic_feat, ((0, 0), (0, Sp - S), (0, 0)))

    # Default batch tile: an 8-aligned divisor of B (<= 64) that leaves >= 2 grid
    # steps, so the input DMA pipelines and v7x can shard the batch over both TCs.
    if batch_tile is None:
        batch_tile = B
        if B % 8 == 0 and B >= 16:
            for t in range(8, min(B // 2, 64) + 1, 8):
                if B % t == 0:
                    batch_tile = t
    assert B % batch_tile == 0, "batch_tile must divide B"
    assert batch_tile == B or batch_tile % 8 == 0, "batch_tile must be 8-aligned or == B"

    # ---- host-side algebraic fusions (all in f32; only the final tensors are cast) --
    in_w = params["in_proj_w"].astype(f32)
    in_b = params["in_proj_b"].astype(f32)
    wq, wk, wv = in_w[:H], in_w[H:2 * H], in_w[2 * H:]
    bq, bk, bv = in_b[:H], in_b[H:2 * H], in_b[2 * H:]

    # Input-independent cls queries: pre-projected, pre-scaled, block-diagonal layout.
    q_verb = (params["verb_cls"][0].astype(f32) @ wq.T + bq) * scale          # [H]
    q_noun = (params["noun_cls"][0].astype(f32) @ wq.T + bq) * scale          # [H]
    head_mask = (jnp.arange(H) // D
                 == jnp.arange(num_heads)[:, None]).astype(f32)               # [nh, H]
    qmat = jnp.concatenate([head_mask.T * q_verb[:, None],
                            head_mask.T * q_noun[:, None]], axis=1)           # [H, 2nh]
    # Fold the K projection into the score matmul (K only ever feeds the scores).
    wkq = wk.T @ qmat                                                         # [H, 2nh]
    bkq = (bk @ qmat).reshape(1, 2 * num_heads)                               # [1, 2nh]

    # Block-diagonal 0/1 head-expansion matrix for both branches: [2nh, 2H].
    e2 = jax.scipy.linalg.block_diag(head_mask, head_mask)

    # Fold out_proj into both classifiers, fuse them block-diagonally and pad the
    # class axis to a lane-dense multiple of 128.
    wo_t = params["out_proj_w"].astype(f32).T
    bo = params["out_proj_b"].astype(f32)
    w_ov = wo_t @ params["verb_w"].astype(f32).T                              # [H, Cv]
    b_ov = bo @ params["verb_w"].astype(f32).T + params["verb_b"].astype(f32)
    w_on = wo_t @ params["noun_w"].astype(f32).T                              # [H, Cn]
    b_on = bo @ params["noun_w"].astype(f32).T + params["noun_b"].astype(f32)
    Cv, Cn = int(w_ov.shape[1]), int(w_on.shape[1])
    Ctot = Cv + Cn
    Ctot_p = max(128, -(-Ctot // 128) * 128)
    wc = jnp.pad(jax.scipy.linalg.block_diag(w_ov, w_on),
                 ((0, 0), (0, Ctot_p - Ctot)))                                # [2H, Ctot_p]
    bc = jnp.pad(jnp.concatenate([b_ov, b_on]),
                 (0, Ctot_p - Ctot)).reshape(1, Ctot_p)

    # 0/1 block-summation matrix reducing over the (padded) sequence per batch row.
    rmat = (jnp.arange(batch_tile * Sp) // Sp
            == jnp.arange(batch_tile)[:, None]).astype(cdt)                   # [bt, bt*Sp]

    # Matmul operands in the compute dtype (bf16 by default -> full MXU rate on
    # v6e/v7x); biases stay f32 and are added to the f32 accumulators.
    sem = semantic_feat.astype(cdt)
    wkq = wkq.astype(cdt)
    wv_t = wv.T.astype(cdt)
    e2 = e2.astype(cdt)
    wc = wc.astype(cdt)
    bv2 = bv.reshape(1, H)

    nh2 = 2 * num_heads
    grid = (B // batch_tile,)

    def _wspec(shape):
        nd = len(shape)
        if single_buffer_weights:
            # Constant index_map -> never re-fetched; single-buffer to halve VMEM.
            return pl.BlockSpec(shape, lambda *_: (0,) * nd,
                                pipeline_mode=pl.Buffered(1))
        return pl.BlockSpec(shape, lambda *_: (0,) * nd)

    cs = cdt.itemsize
    wbuf = 1 if single_buffer_weights else 2
    weight_bytes = ((H * nh2 + H * H + nh2 * 2 * H
                     + batch_tile * batch_tile * Sp + 2 * H * Ctot_p) * cs
                    + (nh2 + H + Ctot_p) * 4)
    act_bytes = 2 * batch_tile * Sp * H * cs + 2 * batch_tile * Ctot_p * 4
    interm_bytes = 8 * batch_tile * Sp * 2 * H * 4        # generous f32 intermediates
    footprint = wbuf * weight_bytes + act_bytes + interm_bytes
    vmem_limit = int(min(64 * 2 ** 20, max(32 * 2 ** 20, 2 * footprint)))

    flops = int(2 * B * Sp * H * nh2                 # fused score matmul
                + 2 * B * Sp * H * H                 # V projection
                + 2 * B * Sp * nh2 * 2 * H           # head expansion
                + 2 * B * Sp * 2 * H                 # weighting
                + 2 * B * batch_tile * Sp * 2 * H    # block-sum reduction
                + 2 * B * 2 * H * Ctot_p)            # fused classifiers
    transcendentals = int(B * Sp * nh2)
    bytes_accessed = int(B * Sp * H * cs + B * Ctot_p * 4 + wbuf * weight_bytes)

    out_pad = pl.pallas_call(
        functools.partial(_action_decoder_kernel, S),
        out_shape=jax.ShapeDtypeStruct((B, Ctot_p), jnp.float32),
        grid=grid,
        in_specs=[
            pl.BlockSpec((batch_tile, Sp, H), lambda i: (i, 0, 0)),   # semantic feats
            _wspec((H, nh2)),                      # Wk^T @ qmat  (fused score weights)
            _wspec((1, nh2)),                      # bk @ qmat    (fused score bias, f32)
            _wspec((H, H)),                        # Wv^T
            _wspec((1, H)),                        # bv (f32)
            _wspec((nh2, 2 * H)),                  # block-diag head expansion
            _wspec((batch_tile, batch_tile * Sp)), # block-summation matrix
            _wspec((2 * H, Ctot_p)),               # block-diag fused classifiers
            _wspec((1, Ctot_p)),                   # fused classifier bias (f32)
        ],
        out_specs=pl.BlockSpec((batch_tile, Ctot_p), lambda i: (i, 0)),
        compiler_params=pltpu.CompilerParams(
            dimension_semantics=("parallel",),
            vmem_limit_bytes=vmem_limit),
        cost_estimate=pl.CostEstimate(flops=flops,
                                      transcendentals=transcendentals,
                                      bytes_accessed=bytes_accessed),
    )(sem, wkq, bkq, wv_t, bv2, e2, rmat, wc, bc)

    return out_pad[:, :Cv], out_pad[:, Cv:Cv + Cn]


def init_params(key, hidden_dim, verb_class_num, noun_class_num, dtype=jnp.float32):
    """Deterministic init roughly mirroring the PyTorch module's parameter shapes."""
    H = hidden_dim
    ks = jax.random.split(key, 10)

    def u(k, shape, fan_in):
        b = 1.0 / math.sqrt(fan_in)
        return jax.random.uniform(k, shape, dtype, -b, b)

    return {
        "verb_cls": jax.random.normal(ks[0], (1, H), dtype),
        "noun_cls": jax.random.normal(ks[1], (1, H), dtype),
        "in_proj_w": u(ks[2], (3 * H, H), H),     # rows [0:H)=Wq, [H:2H)=Wk, [2H:3H)=Wv
        "in_proj_b": u(ks[3], (3 * H,), H),
        "out_proj_w": u(ks[4], (H, H), H),
        "out_proj_b": u(ks[5], (H,), H),
        "verb_w": u(ks[6], (verb_class_num, H), H),
        "verb_b": u(ks[7], (verb_class_num,), H),
        "noun_w": u(ks[8], (noun_class_num, H), H),
        "noun_b": u(ks[9], (noun_class_num,), H),
    }


def _reference_forward(semantic_feat, params, num_heads):
    """Pure-JAX reference matching PyTorch nn.MultiheadAttention semantics."""
    B, S, H = semantic_feat.shape
    D = H // num_heads
    scale = 1.0 / math.sqrt(D)
    in_w, in_b = params["in_proj_w"], params["in_proj_b"]
    wq, wk, wv = in_w[:H], in_w[H:2 * H], in_w[2 * H:]
    bq, bk, bv = in_b[:H], in_b[H:2 * H], in_b[2 * H:]

    k = (semantic_feat @ wk.T + bk).reshape(B, S, num_heads, D)
    v = (semantic_feat @ wv.T + bv).reshape(B, S, num_heads, D)

    def attend(cls_param):
        q = ((cls_param[0] @ wq.T + bq) * scale).reshape(num_heads, D)
        logits = jnp.einsum('hd,bshd->bhs', q, k)
        p = jax.nn.softmax(logits, axis=-1)
        out = jnp.einsum('bhs,bshd->bhd', p, v).reshape(B, H)
        return out @ params["out_proj_w"].T + params["out_proj_b"]

    verb_feat = attend(params["verb_cls"])
    noun_feat = attend(params["noun_cls"])
    verb_logits = verb_feat @ params["verb_w"].T + params["verb_b"]
    noun_logits = noun_feat @ params["noun_w"].T + params["noun_b"]
    return verb_logits, noun_logits


def _run_case(key, B, S, H, num_heads, Cv, Cn, compute_dtype, atol, rtol):
    k_feat, k_params = jax.random.split(key)
    sem = jax.random.normal(k_feat, (B, S, H), jnp.float32)
    params = init_params(k_params, H, Cv, Cn)
    try:
        out = action_decoder_forward(sem, params, num_heads=num_heads,
                                     compute_dtype=compute_dtype,
                                     single_buffer_weights=True)
        out = jax.block_until_ready(out)
    except Exception:
        # Fallback if pl.Buffered(1) single-buffered weight blocks are not supported
        # by this jax build: use the default double-buffered BlockSpecs instead.
        out = action_decoder_forward(sem, params, num_heads=num_heads,
                                     compute_dtype=compute_dtype,
                                     single_buffer_weights=False)
        out = jax.block_until_ready(out)
    verb, noun = out
    ref_verb, ref_noun = _reference_forward(sem, params, num_heads)
    assert verb.shape == (B, Cv) and noun.shape == (B, Cn)
    assert jnp.allclose(verb, ref_verb, atol=atol, rtol=rtol), "verb mismatch"
    assert jnp.allclose(noun, ref_noun, atol=atol, rtol=rtol), "noun mismatch"


if __name__ == "__main__":
    root = jax.random.PRNGKey(0)
    keys = jax.random.split(root, 3)
    # Small shapes implied by the module: batch=2, seq=8, hidden=64, 8 heads.
    _run_case(keys[0], 2, 8, 64, 8, 10, 16, jnp.float32, 2e-4, 2e-4)   # exact-dtype path
    _run_case(keys[1], 2, 8, 64, 8, 10, 16, jnp.bfloat16, 6e-2, 6e-2)  # default bf16 MXU path
    # Exercises batch_tile < B (grid pipelining / both v7x TCs) and seq padding + masking.
    _run_case(keys[2], 16, 12, 128, 8, 20, 30, jnp.bfloat16, 6e-2, 6e-2)
    print("KERNEL_OK")
</pallas_src>

<mosaic_0001>
module attributes {stable_mosaic.version = 11 : i64} {
  func.func @_action_decoder_kernel(%arg0: i32, %arg1: memref<2x8x64xf32, #tpu.memory_space<vmem>>, %arg2: memref<64x16xf32, #tpu.memory_space<vmem>>, %arg3: memref<1x16xf32, #tpu.memory_space<vmem>>, %arg4: memref<64x64xf32, #tpu.memory_space<vmem>>, %arg5: memref<1x64xf32, #tpu.memory_space<vmem>>, %arg6: memref<16x128xf32, #tpu.memory_space<vmem>>, %arg7: memref<2x16xf32, #tpu.memory_space<vmem>>, %arg8: memref<128x128xf32, #tpu.memory_space<vmem>>, %arg9: memref<1x128xf32, #tpu.memory_space<vmem>>, %arg10: memref<2x128xf32, #tpu.memory_space<vmem>>) attributes {dimension_semantics = [#tpu.dimension_semantics<parallel>], iteration_bounds = array<i64: 1>, scalar_prefetch = 0 : i64, scratch_operands = 0 : i64, tpu.core_type = #tpu.core_type<tc>, window_params = [{transform_indices = @transform_0, window_bounds = array<i64: 2, 8, 64>}, {pipeline_mode = #tpu.pipeline_mode<synchronous>, transform_indices = @transform_1, window_bounds = array<i64: 64, 16>}, {pipeline_mode = #tpu.pipeline_mode<synchronous>, transform_indices = @transform_2, window_bounds = array<i64: 1, 16>}, {pipeline_mode = #tpu.pipeline_mode<synchronous>, transform_indices = @transform_3, window_bounds = array<i64: 64, 64>}, {pipeline_mode = #tpu.pipeline_mode<synchronous>, transform_indices = @transform_4, window_bounds = array<i64: 1, 64>}, {pipeline_mode = #tpu.pipeline_mode<synchronous>, transform_indices = @transform_5, window_bounds = array<i64: 16, 128>}, {pipeline_mode = #tpu.pipeline_mode<synchronous>, transform_indices = @transform_6, window_bounds = array<i64: 2, 16>}, {pipeline_mode = #tpu.pipeline_mode<synchronous>, transform_indices = @transform_7, window_bounds = array<i64: 128, 128>}, {pipeline_mode = #tpu.pipeline_mode<synchronous>, transform_indices = @transform_8, window_bounds = array<i64: 1, 128>}, {transform_indices = @transform_9, window_bounds = array<i64: 2, 128>}]} {
    %c0 = arith.constant 0 : index
    %c0_0 = arith.constant 0 : index
    %c0_1 = arith.constant 0 : index
    %0 = vector.load %arg1[%c0, %c0_0, %c0_1] : memref<2x8x64xf32, #tpu.memory_space<vmem>>, vector<2x8x64xf32>
    %1 = vector.shape_cast %0 : vector<2x8x64xf32> to vector<16x64xf32>
    %c0_2 = arith.constant 0 : index
    %c0_3 = arith.constant 0 : index
    %2 = vector.load %arg2[%c0_2, %c0_3] : memref<64x16xf32, #tpu.memory_space<vmem>>, vector<64x16xf32>
    %cst = arith.constant dense<0.000000e+00> : vector<16x16xf32>
    %3 = tpu.matmul %1, %2, %cst {dimension_numbers = #tpu.dot_dimension_numbers<[1], [0], [0], [1], [0, 0, 1, 1], [], []>} : vector<16x64xf32>, vector<64x16xf32>, vector<16x16xf32> -> vector<16x16xf32>
    %c0_4 = arith.constant 0 : index
    %c0_5 = arith.constant 0 : index
    %4 = vector.load %arg3[%c0_4, %c0_5] : memref<1x16xf32, #tpu.memory_space<vmem>>, vector<1x16xf32>
    %5 = vector.broadcast %4 : vector<1x16xf32> to vector<16x16xf32>
    %6 = arith.addf %3, %5 : vector<16x16xf32>
    %7 = vector.shape_cast %6 : vector<16x16xf32> to vector<2x8x16xf32>
    %c0_6 = arith.constant 0 : index
    %c0_7 = arith.constant 0 : index
    %8 = vector.load %arg4[%c0_6, %c0_7] : memref<64x64xf32, #tpu.memory_space<vmem>>, vector<64x64xf32>
    %cst_8 = arith.constant dense<0.000000e+00> : vector<16x64xf32>
    %9 = tpu.matmul %1, %8, %cst_8 {dimension_numbers = #tpu.dot_dimension_numbers<[1], [0], [0], [1], [0, 0, 1, 1], [], []>} : vector<16x64xf32>, vector<64x64xf32>, vector<16x64xf32> -> vector<16x64xf32>
    %c0_9 = arith.constant 0 : index
    %c0_10 = arith.constant 0 : index
    %10 = vector.load %arg5[%c0_9, %c0_10] : memref<1x64xf32, #tpu.memory_space<vmem>>, vector<1x64xf32>
    %11 = vector.broadcast %10 : vector<1x64xf32> to vector<16x64xf32>
    %12 = arith.addf %9, %11 : vector<16x64xf32>
    %cst_11 = arith.constant dense<0xFF800000> : vector<2x16xf32>
    %13 = vector.multi_reduction <maximumf>, %7, %cst_11 [1] : vector<2x8x16xf32> to vector<2x16xf32>
    %14 = vector.shape_cast %13 : vector<2x16xf32> to vector<2x1x16xf32>
    %15 = vector.broadcast %14 : vector<2x1x16xf32> to vector<2x8x16xf32>
    %16 = arith.subf %7, %15 : vector<2x8x16xf32>
    %17 = math.exp %16 : vector<2x8x16xf32>
    %cst_12 = arith.constant dense<0.000000e+00> : vector<2x16xf32>
    %18 = vector.multi_reduction <add>, %17, %cst_12 [1] : vector<2x8x16xf32> to vector<2x16xf32>
    %19 = vector.shape_cast %18 : vector<2x16xf32> to vector<2x1x16xf32>
    %20 = tpu.reciprocal %19 : vector<2x1x16xf32> -> vector<2x1x16xf32>
    %21 = vector.broadcast %20 : vector<2x1x16xf32> to vector<2x8x16xf32>
    %22 = arith.mulf %17, %21 : vector<2x8x16xf32>
    %23 = vector.shape_cast %22 : vector<2x8x16xf32> to vector<16x16xf32>
    %c0_13 = arith.constant 0 : index
    %c0_14 = arith.constant 0 : index
    %24 = vector.load %arg6[%c0_13, %c0_14] : memref<16x128xf32, #tpu.memory_space<vmem>>, vector<16x128xf32>
    %cst_15 = arith.constant dense<0.000000e+00> : vector<16x128xf32>
    %25 = tpu.matmul %23, %24, %cst_15 {dimension_numbers = #tpu.dot_dimension_numbers<[1], [0], [0], [1], [0, 0, 1, 1], [], []>} : vector<16x16xf32>, vector<16x128xf32>, vector<16x128xf32> -> vector<16x128xf32>
    %26 = tpu.concatenate %12, %12 in 1 : vector<16x64xf32>, vector<16x64xf32> -> vector<16x128xf32>
    %27 = arith.mulf %25, %26 : vector<16x128xf32>
    %c0_16 = arith.constant 0 : index
    %c0_17 = arith.constant 0 : index
    %28 = vector.load %arg7[%c0_16, %c0_17] : memref<2x16xf32, #tpu.memory_space<vmem>>, vector<2x16xf32>
    %cst_18 = arith.constant dense<0.000000e+00> : vector<2x128xf32>
    %29 = tpu.matmul %28, %27, %cst_18 {dimension_numbers = #tpu.dot_dimension_numbers<[1], [0], [0], [1], [0, 0, 1, 1], [], []>} : vector<2x16xf32>, vector<16x128xf32>, vector<2x128xf32> -> vector<2x128xf32>
    %c0_19 = arith.constant 0 : index
    %c0_20 = arith.constant 0 : index
    %30 = vector.load %arg8[%c0_19, %c0_20] : memref<128x128xf32, #tpu.memory_space<vmem>>, vector<128x128xf32>
    %cst_21 = arith.constant dense<0.000000e+00> : vector<2x128xf32>
    %31 = tpu.matmul %29, %30, %cst_21 {dimension_numbers = #tpu.dot_dimension_numbers<[1], [0], [0], [1], [0, 0, 1, 1], [], []>} : vector<2x128xf32>, vector<128x128xf32>, vector<2x128xf32> -> vector<2x128xf32>
    %c0_22 = arith.constant 0 : index
    %c0_23 = arith.constant 0 : index
    %32 = vector.load %arg9[%c0_22, %c0_23] : memref<1x128xf32, #tpu.memory_space<vmem>>, vector<1x128xf32>
    %33 = vector.broadcast %32 : vector<1x128xf32> to vector<2x128xf32>
    %34 = arith.addf %31, %33 : vector<2x128xf32>
    %c0_24 = arith.constant 0 : index
    %c0_25 = arith.constant 0 : index
    %35 = vector.load %arg10[%c0_24, %c0_25] : memref<2x128xf32, #tpu.memory_space<vmem>>, vector<2x128xf32>
    tpu.vector_store %arg10[%c0_24, %c0_25], %34 {strides = array<i32>} : memref<2x128xf32, #tpu.memory_space<vmem>>, vector<2x128xf32>,
    return
  }
  func.func @transform_0(%arg0: i32) -> (i32, i32, i32) {
    %c0_i32 = arith.constant 0 : i32
    %c0_i32_0 = arith.constant 0 : i32
    %c0_i32_1 = arith.constant 0 : i32
    return %arg0, %c0_i32, %c0_i32_0 : i32, i32, i32
  }
  func.func @transform_1(%arg0: i32) -> (i32, i32) {
    %c0_i32 = arith.constant 0 : i32
    %c0_i32_0 = arith.constant 0 : i32
    %c0_i32_1 = arith.constant 0 : i32
    return %c0_i32, %c0_i32_0 : i32, i32
  }
  func.func @transform_2(%arg0: i32) -> (i32, i32) {
    %c0_i32 = arith.constant 0 : i32
    %c0_i32_0 = arith.constant 0 : i32
    %c0_i32_1 = arith.constant 0 : i32
    return %c0_i32, %c0_i32_0 : i32, i32
  }
  func.func @transform_3(%arg0: i32) -> (i32, i32) {
    %c0_i32 = arith.constant 0 : i32
    %c0_i32_0 = arith.constant 0 : i32
    %c0_i32_1 = arith.constant 0 : i32
    return %c0_i32, %c0_i32_0 : i32, i32
  }
  func.func @transform_4(%arg0: i32) -> (i32, i32) {
    %c0_i32 = arith.constant 0 : i32
    %c0_i32_0 = arith.constant 0 : i32
    %c0_i32_1 = arith.constant 0 : i32
    return %c0_i32, %c0_i32_0 : i32, i32
  }
  func.func @transform_5(%arg0: i32) -> (i32, i32) {
    %c0_i32 = arith.constant 0 : i32
    %c0_i32_0 = arith.constant 0 : i32
    %c0_i32_1 = arith.constant 0 : i32
    return %c0_i32, %c0_i32_0 : i32, i32
  }
  func.func @transform_6(%arg0: i32) -> (i32, i32) {
    %c0_i32 = arith.constant 0 : i32
    %c0_i32_0 = arith.constant 0 : i32
    %c0_i32_1 = arith.constant 0 : i32
    return %c0_i32, %c0_i32_0 : i32, i32
  }
  func.func @transform_7(%arg0: i32) -> (i32, i32) {
    %c0_i32 = arith.constant 0 : i32
    %c0_i32_0 = arith.constant 0 : i32
    %c0_i32_1 = arith.constant 0 : i32
    return %c0_i32, %c0_i32_0 : i32, i32
  }
  func.func @transform_8(%arg0: i32) -> (i32, i32) {
    %c0_i32 = arith.constant 0 : i32
    %c0_i32_0 = arith.constant 0 : i32
    %c0_i32_1 = arith.constant 0 : i32
    return %c0_i32, %c0_i32_0 : i32, i32
  }
  func.func @transform_9(%arg0: i32) -> (i32, i32) {
    %c0_i32 = arith.constant 0 : i32
    %c0_i32_0 = arith.constant 0 : i32
    return %arg0, %c0_i32 : i32, i32
  }
}

module attributes {stable_mosaic.version = 11 : i64} {
  func.func @_action_decoder_kernel(%arg0: i32, %arg1: memref<2x8x64xf32, #tpu.memory_space<vmem>>, %arg2: memref<64x16xf32, #tpu.memory_space<vmem>>, %arg3: memref<1x16xf32, #tpu.memory_space<vmem>>, %arg4: memref<64x64xf32, #tpu.memory_space<vmem>>, %arg5: memref<1x64xf32, #tpu.memory_space<vmem>>, %arg6: memref<16x128xf32, #tpu.memory_space<vmem>>, %arg7: memref<2x16xf32, #tpu.memory_space<vmem>>, %arg8: memref<128x128xf32, #tpu.memory_space<vmem>>, %arg9: memref<1x128xf32, #tpu.memory_space<vmem>>, %arg10: memref<2x128xf32, #tpu.memory_space<vmem>>) attributes {dimension_semantics = [#tpu.dimension_semantics<parallel>], iteration_bounds = array<i64: 1>, scalar_prefetch = 0 : i64, scratch_operands = 0 : i64, tpu.core_type = #tpu.core_type<tc>, window_params = [{transform_indices = @transform_0, window_bounds = array<i64: 2, 8, 64>}, {pipeline_mode = #tpu.pipeline_mode<synchronous>, transform_indices = @transform_1, window_bounds = array<i64: 64, 16>}, {pipeline_mode = #tpu.pipeline_mode<synchronous>, transform_indices = @transform_2, window_bounds = array<i64: 1, 16>}, {pipeline_mode = #tpu.pipeline_mode<synchronous>, transform_indices = @transform_3, window_bounds = array<i64: 64, 64>}, {pipeline_mode = #tpu.pipeline_mode<synchronous>, transform_indices = @transform_4, window_bounds = array<i64: 1, 64>}, {pipeline_mode = #tpu.pipeline_mode<synchronous>, transform_indices = @transform_5, window_bounds = array<i64: 16, 128>}, {pipeline_mode = #tpu.pipeline_mode<synchronous>, transform_indices = @transform_6, window_bounds = array<i64: 2, 16>}, {pipeline_mode = #tpu.pipeline_mode<synchronous>, transform_indices = @transform_7, window_bounds = array<i64: 128, 128>}, {pipeline_mode = #tpu.pipeline_mode<synchronous>, transform_indices = @transform_8, window_bounds = array<i64: 1, 128>}, {transform_indices = @transform_9, window_bounds = array<i64: 2, 128>}]} {
    %c0 = arith.constant 0 : index
    %c0_0 = arith.constant 0 : index
    %c0_1 = arith.constant 0 : index
    %0 = vector.load %arg1[%c0, %c0_0, %c0_1] : memref<2x8x64xf32, #tpu.memory_space<vmem>>, vector<2x8x64xf32>
    %1 = vector.shape_cast %0 : vector<2x8x64xf32> to vector<16x64xf32>
    %c0_2 = arith.constant 0 : index
    %c0_3 = arith.constant 0 : index
    %2 = vector.load %arg2[%c0_2, %c0_3] : memref<64x16xf32, #tpu.memory_space<vmem>>, vector<64x16xf32>
    %cst = arith.constant dense<0.000000e+00> : vector<16x16xf32>
    %3 = tpu.matmul %1, %2, %cst {dimension_numbers = #tpu.dot_dimension_numbers<[1], [0], [0], [1], [0, 0, 1, 1], [], []>} : vector<16x64xf32>, vector<64x16xf32>, vector<16x16xf32> -> vector<16x16xf32>
    %c0_4 = arith.constant 0 : index
    %c0_5 = arith.constant 0 : index
    %4 = vector.load %arg3[%c0_4, %c0_5] : memref<1x16xf32, #tpu.memory_space<vmem>>, vector<1x16xf32>
    %5 = vector.broadcast %4 : vector<1x16xf32> to vector<16x16xf32>
    %6 = arith.addf %3, %5 : vector<16x16xf32>
    %7 = vector.shape_cast %6 : vector<16x16xf32> to vector<2x8x16xf32>
    %c0_6 = arith.constant 0 : index
    %c0_7 = arith.constant 0 : index
    %8 = vector.load %arg4[%c0_6, %c0_7] : memref<64x64xf32, #tpu.memory_space<vmem>>, vector<64x64xf32>
    %cst_8 = arith.constant dense<0.000000e+00> : vector<16x64xf32>
    %9 = tpu.matmul %1, %8, %cst_8 {dimension_numbers = #tpu.dot_dimension_numbers<[1], [0], [0], [1], [0, 0, 1, 1], [], []>} : vector<16x64xf32>, vector<64x64xf32>, vector<16x64xf32> -> vector<16x64xf32>
    %c0_9 = arith.constant 0 : index
    %c0_10 = arith.constant 0 : index
    %10 = vector.load %arg5[%c0_9, %c0_10] : memref<1x64xf32, #tpu.memory_space<vmem>>, vector<1x64xf32>
    %11 = vector.broadcast %10 : vector<1x64xf32> to vector<16x64xf32>
    %12 = arith.addf %9, %11 : vector<16x64xf32>
    %cst_11 = arith.constant dense<0xFF800000> : vector<2x16xf32>
    %13 = vector.multi_reduction <maximumf>, %7, %cst_11 [1] : vector<2x8x16xf32> to vector<2x16xf32>
    %14 = vector.shape_cast %13 : vector<2x16xf32> to vector<2x1x16xf32>
    %15 = vector.broadcast %14 : vector<2x1x16xf32> to vector<2x8x16xf32>
    %16 = arith.subf %7, %15 : vector<2x8x16xf32>
    %17 = math.exp %16 : vector<2x8x16xf32>
    %cst_12 = arith.constant dense<0.000000e+00> : vector<2x16xf32>
    %18 = vector.multi_reduction <add>, %17, %cst_12 [1] : vector<2x8x16xf32> to vector<2x16xf32>
    %19 = vector.shape_cast %18 : vector<2x16xf32> to vector<2x1x16xf32>
    %20 = tpu.reciprocal %19 : vector<2x1x16xf32> -> vector<2x1x16xf32>
    %21 = vector.broadcast %20 : vector<2x1x16xf32> to vector<2x8x16xf32>
    %22 = arith.mulf %17, %21 : vector<2x8x16xf32>
    %23 = vector.shape_cast %22 : vector<2x8x16xf32> to vector<16x16xf32>
    %c0_13 = arith.constant 0 : index
    %c0_14 = arith.constant 0 : index
    %24 = vector.load %arg6[%c0_13, %c0_14] : memref<16x128xf32, #tpu.memory_space<vmem>>, vector<16x128xf32>
    %cst_15 = arith.constant dense<0.000000e+00> : vector<16x128xf32>
    %25 = tpu.matmul %23, %24, %cst_15 {dimension_numbers = #tpu.dot_dimension_numbers<[1], [0], [0], [1], [0, 0, 1, 1], [], []>} : vector<16x16xf32>, vector<16x128xf32>, vector<16x128xf32> -> vector<16x128xf32>
    %26 = tpu.concatenate %12, %12 in 1 : vector<16x64xf32>, vector<16x64xf32> -> vector<16x128xf32>
    %27 = arith.mulf %25, %26 : vector<16x128xf32>
    %c0_16 = arith.constant 0 : index
    %c0_17 = arith.constant 0 : index
    %28 = vector.load %arg7[%c0_16, %c0_17] : memref<2x16xf32, #tpu.memory_space<vmem>>, vector<2x16xf32>
    %cst_18 = arith.constant dense<0.000000e+00> : vector<2x128xf32>
    %29 = tpu.matmul %28, %27, %cst_18 {dimension_numbers = #tpu.dot_dimension_numbers<[1], [0], [0], [1], [0, 0, 1, 1], [], []>} : vector<2x16xf32>, vector<16x128xf32>, vector<2x128xf32> -> vector<2x128xf32>
    %c0_19 = arith.constant 0 : index
    %c0_20 = arith.constant 0 : index
    %30 = vector.load %arg8[%c0_19, %c0_20] : memref<128x128xf32, #tpu.memory_space<vmem>>, vector<128x128xf32>
    %cst_21 = arith.constant dense<0.000000e+00> : vector<2x128xf32>
    %31 = tpu.matmul %29, %30, %cst_21 {dimension_numbers = #tpu.dot_dimension_numbers<[1], [0], [0], [1], [0, 0, 1, 1], [], []>} : vector<2x128xf32>, vector<128x128xf32>, vector<2x128xf32> -> vector<2x128xf32>
    %c0_22 = arith.constant 0 : index
    %c0_23 = arith.constant 0 : index
    %32 = vector.load %arg9[%c0_22, %c0_23] : memref<1x128xf32, #tpu.memory_space<vmem>>, vector<1x128xf32>
    %33 = vector.broadcast %32 : vector<1x128xf32> to vector<2x128xf32>
    %34 = arith.addf %31, %33 : vector<2x128xf32>
    %c0_24 = arith.constant 0 : index
    %c0_25 = arith.constant 0 : index
    %35 = vector.load %arg10[%c0_24, %c0_25] : memref<2x128xf32, #tpu.memory_space<vmem>>, vector<2x128xf32>
    tpu.vector_store %arg10[%c0_24, %c0_25], %34 {strides = array<i32>} : memref<2x128xf32, #tpu.memory_space<vmem>>, vector<2x128xf32>,
    return
  }
  func.func @transform_0(%arg0: i32) -> (i32, i32, i32) {
    %c0_i32 = arith.constant 0 : i32
    %c0_i32_0 = arith.constant 0 : i32
    %c0_i32_1 = arith.constant 0 : i32
    return %arg0, %c0_i32, %c0_i32_0 : i32, i32, i32
  }
  func.func @transform_1(%arg0: i32) -> (i32, i32) {
    %c0_i32 = arith.constant 0 : i32
    %c0_i32_0 = arith.constant 0 : i32
    %c0_i32_1 = arith.constant 0 : i32
    return %c0_i32, %c0_i32_0 : i32, i32
  }
  func.func @transform_2(%arg0: i32) -> (i32, i32) {
    %c0_i32 = arith.constant 0 : i32
    %c0_i32_0 = arith.constant 0 : i32
    %c0_i32_1 = arith.constant 0 : i32
    return %c0_i32, %c0_i32_0 : i32, i32
  }
  func.func @transform_3(%arg0: i32) -> (i32, i32) {
    %c0_i32 = arith.constant 0 : i32
    %c0_i32_0 = arith.constant 0 : i32
    %c0_i32_1 = arith.constant 0 : i32
    return %c0_i32, %c0_i32_0 : i32, i32
  }
  func.func @transform_4(%arg0: i32) -> (i32, i32) {
    %c0_i32 = arith.constant 0 : i32
    %c0_i32_0 = arith.constant 0 : i32
    %c0_i32_1 = arith.constant 0 : i32
    return %c0_i32, %c0_i32_0 : i32, i32
  }
  func.func @transform_5(%arg0: i32) -> (i32, i32) {
    %c0_i32 = arith.constant 0 : i32
    %c0_i32_0 = arith.constant 0 : i32
    %c0_i32_1 = arith.constant 0 : i32
    return %c0_i32, %c0_i32_0 : i32, i32
  }
  func.func @transform_6(%arg0: i32) -> (i32, i32) {
    %c0_i32 = arith.constant 0 : i32
    %c0_i32_0 = arith.constant 0 : i32
    %c0_i32_1 = arith.constant 0 : i32
    return %c0_i32, %c0_i32_0 : i32, i32
  }
  func.func @transform_7(%arg0: i32) -> (i32, i32) {
    %c0_i32 = arith.constant 0 : i32
    %c0_i32_0 = arith.constant 0 : i32
    %c0_i32_1 = arith.constant 0 : i32
    return %c0_i32, %c0_i32_0 : i32, i32
  }
  func.func @transform_8(%arg0: i32) -> (i32, i32) {
    %c0_i32 = arith.constant 0 : i32
    %c0_i32_0 = arith.constant 0 : i32
    %c0_i32_1 = arith.constant 0 : i32
    return %c0_i32, %c0_i32_0 : i32, i32
  }
  func.func @transform_9(%arg0: i32) -> (i32, i32) {
    %c0_i32 = arith.constant 0 : i32
    %c0_i32_0 = arith.constant 0 : i32
    return %arg0, %c0_i32 : i32, i32
  }
}

</mosaic_0001>

<llo_original>
// kernel: action_decoder_forward.1
$region0: #{action_decoder_forward.1}
  #allocation0 [shape = 'u32[]', space=smem, size = 0x4, offset = 0x4, fixed_abs, tag = 'smem constant byte address 0x4 - core index']
  #allocation1 [shape = 'u32[144,128]{1,0:T(1,128)}', space=vmem, size = 0x12000, scoped, tag = 'internal scratch']
  %s0 = inlined_call_operand.vmem [shape: f32[2,8,64], index: 0, kind: input, shape index: {}]
  %s1 = inlined_call_operand.vmem [shape: f32[64,16], index: 1, kind: input, shape index: {}]
  %s2 = inlined_call_operand.vmem [shape: f32[1,16], index: 2, kind: input, shape index: {}]
  %s3 = inlined_call_operand.vmem [shape: f32[64,64], index: 3, kind: input, shape index: {}]
  %s4 = inlined_call_operand.vmem [shape: f32[1,64], index: 4, kind: input, shape index: {}]
  %s5 = inlined_call_operand.vmem [shape: f32[16,128], index: 5, kind: input, shape index: {}]
  %s6 = inlined_call_operand.vmem [shape: f32[2,16], index: 6, kind: input, shape index: {}]
  %s7 = inlined_call_operand.vmem [shape: f32[128,128], index: 7, kind: input, shape index: {}]
  %s8 = inlined_call_operand.vmem [shape: f32[1,128], index: 8, kind: input, shape index: {}]
  %s9 = inlined_call_operand.vmem [shape: f32[2,128], index: 9, kind: output, shape index: {}]
  %s10 = sld [smem:[#allocation0]]
  $region46: #{action_decoder_forward.1} parent=0
    _
  %s12 = ssub.s32 1, %s10
  %s13 = scalar_select 0, %s12, %s10
  // Predicated region
  $region2: #{action_decoder_forward.1} parent=0 // pred_check
    _
  $region3: #{action_decoder_forward.1} parent=0 // pred_check_branch
    %15 = sbr.rel (0) target = $region5
  $region4: #{action_decoder_forward.1} parent=0 // pred_region
    _
  $region5: #{action_decoder_forward.1} parent=0 // pred_fallthru
    _
  // Predicated region
  $region6: #{action_decoder_forward.1} parent=0 // pred_check
    _
  $region7: #{action_decoder_forward.1} parent=0 // pred_check_branch
    %17 = sbr.rel (0) target = $region9
  $region8: #{action_decoder_forward.1} parent=0 // pred_region
    _
  $region9: #{action_decoder_forward.1} parent=0 // pred_fallthru
    _
  // Predicated region
  $region10: #{action_decoder_forward.1} parent=0 // pred_check
    _
  $region11: #{action_decoder_forward.1} parent=0 // pred_check_branch
    %19 = sbr.rel (0) target = $region13
  $region12: #{action_decoder_forward.1} parent=0 // pred_region
    _
  $region13: #{action_decoder_forward.1} parent=0 // pred_fallthru
    _
  // Predicated region
  $region14: #{action_decoder_forward.1} parent=0 // pred_check
    _
  $region15: #{action_decoder_forward.1} parent=0 // pred_check_branch
    %21 = sbr.rel (0) target = $region17
  $region16: #{action_decoder_forward.1} parent=0 // pred_region
    _
  $region17: #{action_decoder_forward.1} parent=0 // pred_fallthru
    _
  // Predicated region
  $region18: #{action_decoder_forward.1} parent=0 // pred_check
    _
  $region19: #{action_decoder_forward.1} parent=0 // pred_check_branch
    %23 = sbr.rel (0) target = $region21
  $region20: #{action_decoder_forward.1} parent=0 // pred_region
    _
  $region21: #{action_decoder_forward.1} parent=0 // pred_fallthru
    _
  // Predicated region
  $region22: #{action_decoder_forward.1} parent=0 // pred_check
    _
  $region23: #{action_decoder_forward.1} parent=0 // pred_check_branch
    %25 = sbr.rel (0) target = $region25
  $region24: #{action_decoder_forward.1} parent=0 // pred_region
    _
  $region25: #{action_decoder_forward.1} parent=0 // pred_fallthru
    _
  // Predicated region
  $region26: #{action_decoder_forward.1} parent=0 // pred_check
    _
  $region27: #{action_decoder_forward.1} parent=0 // pred_check_branch
    %27 = sbr.rel (0) target = $region29
  $region28: #{action_decoder_forward.1} parent=0 // pred_region
    _
  $region29: #{action_decoder_forward.1} parent=0 // pred_fallthru
    _
  // Predicated region
  $region30: #{action_decoder_forward.1} parent=0 // pred_check
    _
  $region31: #{action_decoder_forward.1} parent=0 // pred_check_branch
    %29 = sbr.rel (0) target = $region33
  $region32: #{action_decoder_forward.1} parent=0 // pred_region
    _
  $region33: #{action_decoder_forward.1} parent=0 // pred_fallthru
    _
  // Predicated region
  $region34: #{action_decoder_forward.1} parent=0 // pred_check
    _
  $region35: #{action_decoder_forward.1} parent=0 // pred_check_branch
    %31 = sbr.rel (0) target = $region37
  $region36: #{action_decoder_forward.1} parent=0 // pred_region
    _
  $region37: #{action_decoder_forward.1} parent=0 // pred_fallthru
    _
  %v32 = vld [vmem:[%s0] sm:$0xff]
  %v33 = vld [vmem:[%s0 + $0x8] sm:$0xff]
  %v34 = vld [vmem:[%s1] sm:$0xff]
  %v35 = vld [vmem:[%s1 + $0x8] sm:$0xff]
  %v36 = vld [vmem:[%s1 + $0x10] sm:$0xff]
  %v37 = vld [vmem:[%s1 + $0x18] sm:$0xff]
  %v38 = vld [vmem:[%s1 + $0x20] sm:$0xff]
  %v39 = vld [vmem:[%s1 + $0x28] sm:$0xff]
  %v40 = vld [vmem:[%s1 + $0x30] sm:$0xff]
  %v41 = vld [vmem:[%s1 + $0x38] sm:$0xff]
  %v42 = vld [vmem:[%s2] sm:$0x1]
  %v44 = vlaneseq
  %v45 = vshrl.u32 %v44, 7
  %v46 = vsub.s32 0, %v45
  %v47 = vrot.slane %v42, %v46
  %vm49 = vcmask 523264
  %v51 = vsel %vm49, %v32, 0
  %v54 = vsel %vm49, %v33, 0
  %56 = vmatprep.subr.mxu0 0.0
  %57 = vmatpush1.msra.mxu0 0.0
  %58 = vmatprep.subr.mxu0 0.0
  %59 = vmatpush1.msra.mxu0 0.0
  %60 = vmatprep.subr.mxu0 0.0
  %61 = vmatpush1.msra.mxu0 0.0
  %62 = vmatprep.subr.mxu0 0.0
  %63 = vmatpush1.msra.mxu0 0.0
  %64 = vmatprep.subr.mxu0 0.0
  %65 = vmatpush1.msra.mxu0 0.0
  %66 = vmatprep.subr.mxu0 0.0
  %67 = vmatpush1.msra.mxu0 0.0
  %68 = vmatprep.subr.mxu0 0.0
  %69 = vmatpush1.msra.mxu0 0.0
  %70 = vmatprep.subr.mxu0 0.0
  %71 = vmatpush1.msra.mxu0 0.0
  %72 = vmatprep.subr.mxu0 0.0
  %73 = vmatpush1.msra.mxu0 %v41
  %74 = vmatprep.subr.mxu0 0.0
  %75 = vmatpush1.msra.mxu0 %v40
  %76 = vmatprep.subr.mxu0 0.0
  %77 = vmatpush1.msra.mxu0 %v39
  %78 = vmatprep.subr.mxu0 0.0
  %79 = vmatpush1.msra.mxu0 %v38
  %80 = vmatprep.subr.mxu0 0.0
  %81 = vmatpush1.msra.mxu0 %v37
  %82 = vmatprep.subr.mxu0 0.0
  %83 = vmatpush1.msra.mxu0 %v36
  %84 = vmatprep.subr.mxu0 0.0
  %85 = vmatpush1.msra.mxu0 %v35
  %86 = vmatprep.subr.mxu0 0.0
  %87 = vmatpush1.msra.mxu0 %v34
  %88 = vmatprep.subr.mxu0 0.0
  %89 = vmatpush2.msra.mxu0 0.0
  %90 = vmatprep.subr.mxu0 0.0
  %91 = vmatpush2.msra.mxu0 0.0
  %92 = vmatprep.subr.mxu0 0.0
  %93 = vmatpush2.msra.mxu0 0.0
  %94 = vmatprep.subr.mxu0 0.0
  %95 = vmatpush2.msra.mxu0 0.0
  %96 = vmatprep.subr.mxu0 0.0
  %97 = vmatpush2.msra.mxu0 0.0
  %98 = vmatprep.subr.mxu0 0.0
  %99 = vmatpush2.msra.mxu0 0.0
  %100 = vmatprep.subr.mxu0 0.0
  %101 = vmatpush2.msra.mxu0 0.0
  %102 = vmatprep.subr.mxu0 0.0
  %103 = vmatpush2.msra.mxu0 0.0
  %104 = vmatprep.subr.mxu0 0.0
  %105 = vmatpush2.msra.mxu0 0.0
  %106 = vmatprep.subr.mxu0 0.0
  %107 = vmatpush2.msra.mxu0 0.0
  %108 = vmatprep.subr.mxu0 0.0
  %109 = vmatpush2.msra.mxu0 0.0
  %110 = vmatprep.subr.mxu0 0.0
  %111 = vmatpush2.msra.mxu0 0.0
  %112 = vmatprep.subr.mxu0 0.0
  %113 = vmatpush2.msra.mxu0 0.0
  %114 = vmatprep.subr.mxu0 0.0
  %115 = vmatpush2.msra.mxu0 0.0
  %116 = vmatprep.subr.mxu0 0.0
  %117 = vmatpush2.msra.mxu0 0.0
  %118 = vmatprep.subr.mxu0 0.0
  %119 = vmatpush2.msra.mxu0 0.0
  %120 = vmatprep.mubr.f32.mxu0 0.0
  %121 = vmatmul.mubr.f32.gmra.mxu0 %v51
  %v122 = vpop.f32.mrf.mxu0
  %v123 = vadd.f32 %v47, %v122
  %v124 = vpop.f32.mrf.mxu0
  %125 = vmatprep.mubr.f32.mxu0 0.0
  %126 = vmatmul.mubr.f32.gmra.mxu0 %v54
  %v127 = vpop.f32.mrf.mxu0
  %v128 = vadd.f32 %v47, %v127
  %v129 = vpop.f32.mrf.mxu0
  %130 = vdwg.mxu0
  %v131 = vld [vmem:[%s3] sm:$0xff]
  %v132 = vld [vmem:[%s3 + $0x8] sm:$0xff]
  %v133 = vld [vmem:[%s3 + $0x10] sm:$0xff]
  %v134 = vld [vmem:[%s3 + $0x18] sm:$0xff]
  %v135 = vld [vmem:[%s3 + $0x20] sm:$0xff]
  %v136 = vld [vmem:[%s3 + $0x28] sm:$0xff]
  %v137 = vld [vmem:[%s3 + $0x30] sm:$0xff]
  %v138 = vld [vmem:[%s3 + $0x38] sm:$0xff]
  %v139 = vld [vmem:[%s4] sm:$0x1]
  %v141 = vlaneseq
  %v142 = vshrl.u32 %v141, 7
  %v143 = vsub.s32 0, %v142
  %v144 = vrot.slane %v139, %v143
  %146 = vmatprep.subr.mxu0 0.0
  %147 = vmatpush1.msra.mxu0 0.0
  %148 = vmatprep.subr.mxu0 0.0
  %149 = vmatpush1.msra.mxu0 0.0
  %150 = vmatprep.subr.mxu0 0.0
  %151 = vmatpush1.msra.mxu0 0.0
  %152 = vmatprep.subr.mxu0 0.0
  %153 = vmatpush1.msra.mxu0 0.0
  %154 = vmatprep.subr.mxu0 0.0
  %155 = vmatpush1.msra.mxu0 0.0
  %156 = vmatprep.subr.mxu0 0.0
  %157 = vmatpush1.msra.mxu0 0.0
  %158 = vmatprep.subr.mxu0 0.0
  %159 = vmatpush1.msra.mxu0 0.0
  %160 = vmatprep.subr.mxu0 0.0
  %161 = vmatpush1.msra.mxu0 0.0
  %162 = vmatprep.subr.mxu0 0.0
  %163 = vmatpush1.msra.mxu0 %v138
  %164 = vmatprep.subr.mxu0 0.0
  %165 = vmatpush1.msra.mxu0 %v137
  %166 = vmatprep.subr.mxu0 0.0
  %167 = vmatpush1.msra.mxu0 %v136
  %168 = vmatprep.subr.mxu0 0.0
  %169 = vmatpush1.msra.mxu0 %v135
  %170 = vmatprep.subr.mxu0 0.0
  %171 = vmatpush1.msra.mxu0 %v134
  %172 = vmatprep.subr.mxu0 0.0
  %173 = vmatpush1.msra.mxu0 %v133
  %174 = vmatprep.subr.mxu0 0.0
  %175 = vmatpush1.msra.mxu0 %v132
  %176 = vmatprep.subr.mxu0 0.0
  %177 = vmatpush1.msra.mxu0 %v131
  %178 = vmatprep.subr.mxu0 0.0
  %179 = vmatpush2.msra.mxu0 0.0
  %180 = vmatprep.subr.mxu0 0.0
  %181 = vmatpush2.msra.mxu0 0.0
  %182 = vmatprep.subr.mxu0 0.0
  %183 = vmatpush2.msra.mxu0 0.0
  %184 = vmatprep.subr.mxu0 0.0
  %185 = vmatpush2.msra.mxu0 0.0
  %186 = vmatprep.subr.mxu0 0.0
  %187 = vmatpush2.msra.mxu0 0.0
  %188 = vmatprep.subr.mxu0 0.0
  %189 = vmatpush2.msra.mxu0 0.0
  %190 = vmatprep.subr.mxu0 0.0
  %191 = vmatpush2.msra.mxu0 0.0
  %192 = vmatprep.subr.mxu0 0.0
  %193 = vmatpush2.msra.mxu0 0.0
  %194 = vmatprep.subr.mxu0 0.0
  %195 = vmatpush2.msra.mxu0 0.0
  %196 = vmatprep.subr.mxu0 0.0
  %197 = vmatpush2.msra.mxu0 0.0
  %198 = vmatprep.subr.mxu0 0.0
  %199 = vmatpush2.msra.mxu0 0.0
  %200 = vmatprep.subr.mxu0 0.0
  %201 = vmatpush2.msra.mxu0 0.0
  %202 = vmatprep.subr.mxu0 0.0
  %203 = vmatpush2.msra.mxu0 0.0
  %204 = vmatprep.subr.mxu0 0.0
  %205 = vmatpush2.msra.mxu0 0.0
  %206 = vmatprep.subr.mxu0 0.0
  %207 = vmatpush2.msra.mxu0 0.0
  %208 = vmatprep.subr.mxu0 0.0
  %209 = vmatpush2.msra.mxu0 0.0
  %210 = vmatprep.mubr.f32.mxu0 0.0
  %211 = vmatmul.mubr.f32.gmra.mxu0 %v51
  %v212 = vpop.f32.mrf.mxu0
  %v213 = vadd.f32 %v144, %v212
  %v214 = vpop.f32.mrf.mxu0
  %215 = vmatprep.mubr.f32.mxu0 0.0
  %216 = vmatmul.mubr.f32.gmra.mxu0 %v54
  %v217 = vpop.f32.mrf.mxu0
  %v218 = vadd.f32 %v144, %v217
  %v219 = vpop.f32.mrf.mxu0
  %220 = vdwg.mxu0
  %vm221 = vcmask 130048
  %v222 = vsel %vm221, %v123, -inf
  %v223 = vrot.slane %v222, 4
  %v224 = vmax.f32 %v222, %v223
  %v225 = vrot.slane %v224, 2
  %v226 = vmax.f32 %v224, %v225
  %v227 = vrot.slane %v226, 1
  %v228 = vmax.f32 %v226, %v227
  %v229 = vsel %vm221, %v128, -inf
  %v230 = vrot.slane %v229, 4
  %v231 = vmax.f32 %v229, %v230
  %v232 = vrot.slane %v231, 2
  %v233 = vmax.f32 %v231, %v232
  %v234 = vrot.slane %v233, 1
  %v235 = vmax.f32 %v233, %v234
  %v236 = vsub.f32 %v123, %v228
  %v237 = vsub.f32 %v128, %v235
  %v238 = vmul.f32 %v236, 1.442695
  %v239 = vpow.pop %v238
  %v240 = vmul.f32 %v237, 1.442695
  %v241 = vpow.pop %v240
  %v242 = vsel %vm221, %v239, 0.0
  %v243 = vrot.slane %v242, 4
  %v244 = vadd.f32 %v242, %v243
  %v245 = vrot.slane %v244, 2
  %v246 = vadd.f32 %v244, %v245
  %v247 = vrot.slane %v246, 1
  %v248 = vadd.f32 %v246, %v247
  %v249 = vsel %vm221, %v241, 0.0
  %v250 = vrot.slane %v249, 4
  %v251 = vadd.f32 %v249, %v250
  %v252 = vrot.slane %v251, 2
  %v253 = vadd.f32 %v251, %v252
  %v254 = vrot.slane %v253, 1
  %v255 = vadd.f32 %v253, %v254
  %v256 = vrcp.pop %v248
  %v257 = vrcp.pop %v255
  %v258 = vmul.f32 %v239, %v256
  %v259 = vmul.f32 %v241, %v257
  %v260 = vld [vmem:[%s5] sm:$0xff]
  %v261 = vld [vmem:[%s5 + $0x8] sm:$0xff]
  %v263 = vsel %vm221, %v258, 0
  %v266 = vsel %vm221, %v259, 0
  %268 = vmatprep.subr.mxu0 0.0
  %269 = vmatpush1.msra.mxu0 0.0
  %270 = vmatprep.subr.mxu0 0.0
  %271 = vmatpush1.msra.mxu0 0.0
  %272 = vmatprep.subr.mxu0 0.0
  %273 = vmatpush1.msra.mxu0 0.0
  %274 = vmatprep.subr.mxu0 0.0
  %275 = vmatpush1.msra.mxu0 0.0
  %276 = vmatprep.subr.mxu0 0.0
  %277 = vmatpush1.msra.mxu0 0.0
  %278 = vmatprep.subr.mxu0 0.0
  %279 = vmatpush1.msra.mxu0 0.0
  %280 = vmatprep.subr.mxu0 0.0
  %281 = vmatpush1.msra.mxu0 0.0
  %282 = vmatprep.subr.mxu0 0.0
  %283 = vmatpush1.msra.mxu0 0.0
  %284 = vmatprep.subr.mxu0 0.0
  %285 = vmatpush1.msra.mxu0 0.0
  %286 = vmatprep.subr.mxu0 0.0
  %287 = vmatpush1.msra.mxu0 0.0
  %288 = vmatprep.subr.mxu0 0.0
  %289 = vmatpush1.msra.mxu0 0.0
  %290 = vmatprep.subr.mxu0 0.0
  %291 = vmatpush1.msra.mxu0 0.0
  %292 = vmatprep.subr.mxu0 0.0
  %293 = vmatpush1.msra.mxu0 0.0
  %294 = vmatprep.subr.mxu0 0.0
  %295 = vmatpush1.msra.mxu0 0.0
  %296 = vmatprep.subr.mxu0 0.0
  %297 = vmatpush1.msra.mxu0 %v261
  %298 = vmatprep.subr.mxu0 0.0
  %299 = vmatpush1.msra.mxu0 %v260
  %300 = vmatprep.subr.mxu0 0.0
  %301 = vmatpush2.msra.mxu0 0.0
  %302 = vmatprep.subr.mxu0 0.0
  %303 = vmatpush2.msra.mxu0 0.0
  %304 = vmatprep.subr.mxu0 0.0
  %305 = vmatpush2.msra.mxu0 0.0
  %306 = vmatprep.subr.mxu0 0.0
  %307 = vmatpush2.msra.mxu0 0.0
  %308 = vmatprep.subr.mxu0 0.0
  %309 = vmatpush2.msra.mxu0 0.0
  %310 = vmatprep.subr.mxu0 0.0
  %311 = vmatpush2.msra.mxu0 0.0
  %312 = vmatprep.subr.mxu0 0.0
  %313 = vmatpush2.msra.mxu0 0.0
  %314 = vmatprep.subr.mxu0 0.0
  %315 = vmatpush2.msra.mxu0 0.0
  %316 = vmatprep.subr.mxu0 0.0
  %317 = vmatpush2.msra.mxu0 0.0
  %318 = vmatprep.subr.mxu0 0.0
  %319 = vmatpush2.msra.mxu0 0.0
  %320 = vmatprep.subr.mxu0 0.0
  %321 = vmatpush2.msra.mxu0 0.0
  %322 = vmatprep.subr.mxu0 0.0
  %323 = vmatpush2.msra.mxu0 0.0
  %324 = vmatprep.subr.mxu0 0.0
  %325 = vmatpush2.msra.mxu0 0.0
  %326 = vmatprep.subr.mxu0 0.0
  %327 = vmatpush2.msra.mxu0 0.0
  %328 = vmatprep.subr.mxu0 0.0
  %329 = vmatpush2.msra.mxu0 0.0
  %330 = vmatprep.subr.mxu0 0.0
  %331 = vmatpush2.msra.mxu0 0.0
  %332 = vmatprep.mubr.f32.mxu0 0.0
  %333 = vmatmul.mubr.f32.gmra.mxu0 %v263
  %v334 = vpop.f32.mrf.mxu0
  %v335 = vadd.f32 0.0, %v334
  %v336 = vpop.f32.mrf.mxu0
  %337 = vmatprep.mubr.f32.mxu0 0.0
  %338 = vmatmul.mubr.f32.gmra.mxu0 %v266
  %v339 = vpop.f32.mrf.mxu0
  %v340 = vadd.f32 0.0, %v339
  %v341 = vpop.f32.mrf.mxu0
  %342 = vdwg.mxu0
  %345 = vrot.lane.b32.xlu0 %v213, 64
  %v346 = vpop.permute.xlu0 %345
  %347 = vrot.lane.b32.xlu0 %v218, 64
  %v348 = vpop.permute.xlu0 %347
  %v351 = vsel %vm49, %v213, %v346
  %v352 = vsel %vm49, %v218, %v348
  %v353 = vmul.f32 %v335, %v351
  %v354 = vmul.f32 %v340, %v352
  %v355 = vld [vmem:[%s6] sm:$0x3]
  %v357 = vsel %vm221, %v355, 0
  %359 = vmatprep.subr.mxu0 0.0
  %360 = vmatpush1.msra.mxu0 0.0
  %361 = vmatprep.subr.mxu0 0.0
  %362 = vmatpush1.msra.mxu0 0.0
  %363 = vmatprep.subr.mxu0 0.0
  %364 = vmatpush1.msra.mxu0 0.0
  %365 = vmatprep.subr.mxu0 0.0
  %366 = vmatpush1.msra.mxu0 0.0
  %367 = vmatprep.subr.mxu0 0.0
  %368 = vmatpush1.msra.mxu0 0.0
  %369 = vmatprep.subr.mxu0 0.0
  %370 = vmatpush1.msra.mxu0 0.0
  %371 = vmatprep.subr.mxu0 0.0
  %372 = vmatpush1.msra.mxu0 0.0
  %373 = vmatprep.subr.mxu0 0.0
  %374 = vmatpush1.msra.mxu0 0.0
  %375 = vmatprep.subr.mxu0 0.0
  %376 = vmatpush1.msra.mxu0 0.0
  %377 = vmatprep.subr.mxu0 0.0
  %378 = vmatpush1.msra.mxu0 0.0
  %379 = vmatprep.subr.mxu0 0.0
  %380 = vmatpush1.msra.mxu0 0.0
  %381 = vmatprep.subr.mxu0 0.0
  %382 = vmatpush1.msra.mxu0 0.0
  %383 = vmatprep.subr.mxu0 0.0
  %384 = vmatpush1.msra.mxu0 0.0
  %385 = vmatprep.subr.mxu0 0.0
  %386 = vmatpush1.msra.mxu0 0.0
  %387 = vmatprep.subr.mxu0 0.0
  %388 = vmatpush1.msra.mxu0 %v354
  %389 = vmatprep.subr.mxu0 0.0
  %390 = vmatpush1.msra.mxu0 %v353
  %391 = vmatprep.subr.mxu0 0.0
  %392 = vmatpush2.msra.mxu0 0.0
  %393 = vmatprep.subr.mxu0 0.0
  %394 = vmatpush2.msra.mxu0 0.0
  %395 = vmatprep.subr.mxu0 0.0
  %396 = vmatpush2.msra.mxu0 0.0
  %397 = vmatprep.subr.mxu0 0.0
  %398 = vmatpush2.msra.mxu0 0.0
  %399 = vmatprep.subr.mxu0 0.0
  %400 = vmatpush2.msra.mxu0 0.0
  %401 = vmatprep.subr.mxu0 0.0
  %402 = vmatpush2.msra.mxu0 0.0
  %403 = vmatprep.subr.mxu0 0.0
  %404 = vmatpush2.msra.mxu0 0.0
  %405 = vmatprep.subr.mxu0 0.0
  %406 = vmatpush2.msra.mxu0 0.0
  %407 = vmatprep.subr.mxu0 0.0
  %408 = vmatpush2.msra.mxu0 0.0
  %409 = vmatprep.subr.mxu0 0.0
  %410 = vmatpush2.msra.mxu0 0.0
  %411 = vmatprep.subr.mxu0 0.0
  %412 = vmatpush2.msra.mxu0 0.0
  %413 = vmatprep.subr.mxu0 0.0
  %414 = vmatpush2.msra.mxu0 0.0
  %415 = vmatprep.subr.mxu0 0.0
  %416 = vmatpush2.msra.mxu0 0.0
  %417 = vmatprep.subr.mxu0 0.0
  %418 = vmatpush2.msra.mxu0 0.0
  %419 = vmatprep.subr.mxu0 0.0
  %420 = vmatpush2.msra.mxu0 0.0
  %421 = vmatprep.subr.mxu0 0.0
  %422 = vmatpush2.msra.mxu0 0.0
  %423 = vmatprep.mubr.f32.mxu0 0.0
  %424 = vmatmul.mubr.f32.gmra.mxu0 %v357
  %v425 = vpop.f32.mrf.mxu0
  %v426 = vadd.f32 0.0, %v425
  %v427 = vpop.f32.mrf.mxu0
  %428 = vdwg.mxu0
  %v429 = vld [vmem:[%s7] sm:$0xff]
  %v430 = vld [vmem:[%s7 + $0x8] sm:$0xff]
  %v431 = vld [vmem:[%s7 + $0x10] sm:$0xff]
  %v432 = vld [vmem:[%s7 + $0x18] sm:$0xff]
  %v433 = vld [vmem:[%s7 + $0x20] sm:$0xff]
  %v434 = vld [vmem:[%s7 + $0x28] sm:$0xff]
  %v435 = vld [vmem:[%s7 + $0x30] sm:$0xff]
  %v436 = vld [vmem:[%s7 + $0x38] sm:$0xff]
  %v437 = vld [vmem:[%s7 + $0x40] sm:$0xff]
  %v438 = vld [vmem:[%s7 + $0x48] sm:$0xff]
  %v439 = vld [vmem:[%s7 + $0x50] sm:$0xff]
  %v440 = vld [vmem:[%s7 + $0x58] sm:$0xff]
  %v441 = vld [vmem:[%s7 + $0x60] sm:$0xff]
  %v442 = vld [vmem:[%s7 + $0x68] sm:$0xff]
  %v443 = vld [vmem:[%s7 + $0x70] sm:$0xff]
  %v444 = vld [vmem:[%s7 + $0x78] sm:$0xff]
  %v445 = vld [vmem:[%s8] sm:$0x1]
  %v447 = vlaneseq
  %v448 = vshrl.u32 %v447, 7
  %v449 = vsub.s32 0, %v448
  %v450 = vrot.slane %v445, %v449
  %452 = vmatprep.subr.mxu0 0.0
  %453 = vmatpush1.msra.mxu0 %v444
  %454 = vmatprep.subr.mxu0 0.0
  %455 = vmatpush1.msra.mxu0 %v443
  %456 = vmatprep.subr.mxu0 0.0
  %457 = vmatpush1.msra.mxu0 %v442
  %458 = vmatprep.subr.mxu0 0.0
  %459 = vmatpush1.msra.mxu0 %v441
  %460 = vmatprep.subr.mxu0 0.0
  %461 = vmatpush1.msra.mxu0 %v440
  %462 = vmatprep.subr.mxu0 0.0
  %463 = vmatpush1.msra.mxu0 %v439
  %464 = vmatprep.subr.mxu0 0.0
  %465 = vmatpush1.msra.mxu0 %v438
  %466 = vmatprep.subr.mxu0 0.0
  %467 = vmatpush1.msra.mxu0 %v437
  %468 = vmatprep.subr.mxu0 0.0
  %469 = vmatpush1.msra.mxu0 %v436
  %470 = vmatprep.subr.mxu0 0.0
  %471 = vmatpush1.msra.mxu0 %v435
  %472 = vmatprep.subr.mxu0 0.0
  %473 = vmatpush1.msra.mxu0 %v434
  %474 = vmatprep.subr.mxu0 0.0
  %475 = vmatpush1.msra.mxu0 %v433
  %476 = vmatprep.subr.mxu0 0.0
  %477 = vmatpush1.msra.mxu0 %v432
  %478 = vmatprep.subr.mxu0 0.0
  %479 = vmatpush1.msra.mxu0 %v431
  %480 = vmatprep.subr.mxu0 0.0
  %481 = vmatpush1.msra.mxu0 %v430
  %482 = vmatprep.subr.mxu0 0.0
  %483 = vmatpush1.msra.mxu0 %v429
  %484 = vmatprep.subr.mxu0 0.0
  %485 = vmatpush2.msra.mxu0 0.0
  %486 = vmatprep.subr.mxu0 0.0
  %487 = vmatpush2.msra.mxu0 0.0
  %488 = vmatprep.subr.mxu0 0.0
  %489 = vmatpush2.msra.mxu0 0.0
  %490 = vmatprep.subr.mxu0 0.0
  %491 = vmatpush2.msra.mxu0 0.0
  %492 = vmatprep.subr.mxu0 0.0
  %493 = vmatpush2.msra.mxu0 0.0
  %494 = vmatprep.subr.mxu0 0.0
  %495 = vmatpush2.msra.mxu0 0.0
  %496 = vmatprep.subr.mxu0 0.0
  %497 = vmatpush2.msra.mxu0 0.0
  %498 = vmatprep.subr.mxu0 0.0
  %499 = vmatpush2.msra.mxu0 0.0
  %500 = vmatprep.subr.mxu0 0.0
  %501 = vmatpush2.msra.mxu0 0.0
  %502 = vmatprep.subr.mxu0 0.0
  %503 = vmatpush2.msra.mxu0 0.0
  %504 = vmatprep.subr.mxu0 0.0
  %505 = vmatpush2.msra.mxu0 0.0
  %506 = vmatprep.subr.mxu0 0.0
  %507 = vmatpush2.msra.mxu0 0.0
  %508 = vmatprep.subr.mxu0 0.0
  %509 = vmatpush2.msra.mxu0 0.0
  %510 = vmatprep.subr.mxu0 0.0
  %511 = vmatpush2.msra.mxu0 0.0
  %512 = vmatprep.subr.mxu0 0.0
  %513 = vmatpush2.msra.mxu0 0.0
  %514 = vmatprep.subr.mxu0 0.0
  %515 = vmatpush2.msra.mxu0 0.0
  %516 = vmatprep.mubr.f32.mxu0 0.0
  %517 = vmatmul.mubr.f32.gmra.mxu0 %v426
  %v518 = vpop.f32.mrf.mxu0
  %v519 = vadd.f32 %v450, %v518
  %v520 = vpop.f32.mrf.mxu0
  %521 = vdwg.mxu0
  %522 = vst [vmem:[%s9] sm:$0x3] %v519
  // Predicated region
  $region38: #{action_decoder_forward.1} parent=0 // pred_check
    _
  $region39: #{action_decoder_forward.1} parent=0 // pred_check_branch
    %524 = sbr.rel (0) target = $region41
  $region40: #{action_decoder_forward.1} parent=0 // pred_region
    _
  $region41: #{action_decoder_forward.1} parent=0 // pred_fallthru
    _
  // Predicated region
  $region42: #{action_decoder_forward.1} parent=0 // pred_check
    _
  $region43: #{action_decoder_forward.1} parent=0 // pred_check_branch
    %526 = sbr.rel (0) target = $region45
  $region44: #{action_decoder_forward.1} parent=0 // pred_region
    _
  $region45: #{action_decoder_forward.1} parent=0 // pred_fallthru
    _

// kernel: action_decoder_forward.1
$region0: #{action_decoder_forward.1}
  #allocation0 [shape = 'u32[]', space=smem, size = 0x4, offset = 0x4, fixed_abs, tag = 'smem constant byte address 0x4 - core index']
  #allocation1 [shape = 'u32[144,128]{1,0:T(1,128)}', space=vmem, size = 0x12000, scoped, tag = 'internal scratch']
  %s0 = inlined_call_operand.vmem [shape: f32[2,8,64], index: 0, kind: input, shape index: {}]
  %s1 = inlined_call_operand.vmem [shape: f32[64,16], index: 1, kind: input, shape index: {}]
  %s2 = inlined_call_operand.vmem [shape: f32[1,16], index: 2, kind: input, shape index: {}]
  %s3 = inlined_call_operand.vmem [shape: f32[64,64], index: 3, kind: input, shape index: {}]
  %s4 = inlined_call_operand.vmem [shape: f32[1,64], index: 4, kind: input, shape index: {}]
  %s5 = inlined_call_operand.vmem [shape: f32[16,128], index: 5, kind: input, shape index: {}]
  %s6 = inlined_call_operand.vmem [shape: f32[2,16], index: 6, kind: input, shape index: {}]
  %s7 = inlined_call_operand.vmem [shape: f32[128,128], index: 7, kind: input, shape index: {}]
  %s8 = inlined_call_operand.vmem [shape: f32[1,128], index: 8, kind: input, shape index: {}]
  %s9 = inlined_call_operand.vmem [shape: f32[2,128], index: 9, kind: output, shape index: {}]
  %s10 = sld [smem:[#allocation0]]
  $region46: #{action_decoder_forward.1} parent=0
    _
  %s12 = ssub.s32 1, %s10
  %s13 = scalar_select 0, %s12, %s10
  // Predicated region
  $region2: #{action_decoder_forward.1} parent=0 // pred_check
    _
  $region3: #{action_decoder_forward.1} parent=0 // pred_check_branch
    %15 = sbr.rel (0) target = $region5
  $region4: #{action_decoder_forward.1} parent=0 // pred_region
    _
  $region5: #{action_decoder_forward.1} parent=0 // pred_fallthru
    _
  // Predicated region
  $region6: #{action_decoder_forward.1} parent=0 // pred_check
    _
  $region7: #{action_decoder_forward.1} parent=0 // pred_check_branch
    %17 = sbr.rel (0) target = $region9
  $region8: #{action_decoder_forward.1} parent=0 // pred_region
    _
  $region9: #{action_decoder_forward.1} parent=0 // pred_fallthru
    _
  // Predicated region
  $region10: #{action_decoder_forward.1} parent=0 // pred_check
    _
  $region11: #{action_decoder_forward.1} parent=0 // pred_check_branch
    %19 = sbr.rel (0) target = $region13
  $region12: #{action_decoder_forward.1} parent=0 // pred_region
    _
  $region13: #{action_decoder_forward.1} parent=0 // pred_fallthru
    _
  // Predicated region
  $region14: #{action_decoder_forward.1} parent=0 // pred_check
    _
  $region15: #{action_decoder_forward.1} parent=0 // pred_check_branch
    %21 = sbr.rel (0) target = $region17
  $region16: #{action_decoder_forward.1} parent=0 // pred_region
    _
  $region17: #{action_decoder_forward.1} parent=0 // pred_fallthru
    _
  // Predicated region
  $region18: #{action_decoder_forward.1} parent=0 // pred_check
    _
  $region19: #{action_decoder_forward.1} parent=0 // pred_check_branch
    %23 = sbr.rel (0) target = $region21
  $region20: #{action_decoder_forward.1} parent=0 // pred_region
    _
  $region21: #{action_decoder_forward.1} parent=0 // pred_fallthru
    _
  // Predicated region
  $region22: #{action_decoder_forward.1} parent=0 // pred_check
    _
  $region23: #{action_decoder_forward.1} parent=0 // pred_check_branch
    %25 = sbr.rel (0) target = $region25
  $region24: #{action_decoder_forward.1} parent=0 // pred_region
    _
  $region25: #{action_decoder_forward.1} parent=0 // pred_fallthru
    _
  // Predicated region
  $region26: #{action_decoder_forward.1} parent=0 // pred_check
    _
  $region27: #{action_decoder_forward.1} parent=0 // pred_check_branch
    %27 = sbr.rel (0) target = $region29
  $region28: #{action_decoder_forward.1} parent=0 // pred_region
    _
  $region29: #{action_decoder_forward.1} parent=0 // pred_fallthru
    _
  // Predicated region
  $region30: #{action_decoder_forward.1} parent=0 // pred_check
    _
  $region31: #{action_decoder_forward.1} parent=0 // pred_check_branch
    %29 = sbr.rel (0) target = $region33
  $region32: #{action_decoder_forward.1} parent=0 // pred_region
    _
  $region33: #{action_decoder_forward.1} parent=0 // pred_fallthru
    _
  // Predicated region
  $region34: #{action_decoder_forward.1} parent=0 // pred_check
    _
  $region35: #{action_decoder_forward.1} parent=0 // pred_check_branch
    %31 = sbr.rel (0) target = $region37
  $region36: #{action_decoder_forward.1} parent=0 // pred_region
    _
  $region37: #{action_decoder_forward.1} parent=0 // pred_fallthru
    _
  %v32 = vld [vmem:[%s0] sm:$0xff]
  %v33 = vld [vmem:[%s0 + $0x8] sm:$0xff]
  %v34 = vld [vmem:[%s1] sm:$0xff]
  %v35 = vld [vmem:[%s1 + $0x8] sm:$0xff]
  %v36 = vld [vmem:[%s1 + $0x10] sm:$0xff]
  %v37 = vld [vmem:[%s1 + $0x18] sm:$0xff]
  %v38 = vld [vmem:[%s1 + $0x20] sm:$0xff]
  %v39 = vld [vmem:[%s1 + $0x28] sm:$0xff]
  %v40 = vld [vmem:[%s1 + $0x30] sm:$0xff]
  %v41 = vld [vmem:[%s1 + $0x38] sm:$0xff]
  %v42 = vld [vmem:[%s2] sm:$0x1]
  %v44 = vlaneseq
  %v45 = vshrl.u32 %v44, 7
  %v46 = vsub.s32 0, %v45
  %v47 = vrot.slane %v42, %v46
  %vm49 = vcmask 523264
  %v51 = vsel %vm49, %v32, 0
  %v54 = vsel %vm49, %v33, 0
  %56 = vmatprep.subr.mxu0 0.0
  %57 = vmatpush1.msra.mxu0 0.0
  %58 = vmatprep.subr.mxu0 0.0
  %59 = vmatpush1.msra.mxu0 0.0
  %60 = vmatprep.subr.mxu0 0.0
  %61 = vmatpush1.msra.mxu0 0.0
  %62 = vmatprep.subr.mxu0 0.0
  %63 = vmatpush1.msra.mxu0 0.0
  %64 = vmatprep.subr.mxu0 0.0
  %65 = vmatpush1.msra.mxu0 0.0
  %66 = vmatprep.subr.mxu0 0.0
  %67 = vmatpush1.msra.mxu0 0.0
  %68 = vmatprep.subr.mxu0 0.0
  %69 = vmatpush1.msra.mxu0 0.0
  %70 = vmatprep.subr.mxu0 0.0
  %71 = vmatpush1.msra.mxu0 0.0
  %72 = vmatprep.subr.mxu0 0.0
  %73 = vmatpush1.msra.mxu0 %v41
  %74 = vmatprep.subr.mxu0 0.0
  %75 = vmatpush1.msra.mxu0 %v40
  %76 = vmatprep.subr.mxu0 0.0
  %77 = vmatpush1.msra.mxu0 %v39
  %78 = vmatprep.subr.mxu0 0.0
  %79 = vmatpush1.msra.mxu0 %v38
  %80 = vmatprep.subr.mxu0 0.0
  %81 = vmatpush1.msra.mxu0 %v37
  %82 = vmatprep.subr.mxu0 0.0
  %83 = vmatpush1.msra.mxu0 %v36
  %84 = vmatprep.subr.mxu0 0.0
  %85 = vmatpush1.msra.mxu0 %v35
  %86 = vmatprep.subr.mxu0 0.0
  %87 = vmatpush1.msra.mxu0 %v34
  %88 = vmatprep.subr.mxu0 0.0
  %89 = vmatpush2.msra.mxu0 0.0
  %90 = vmatprep.subr.mxu0 0.0
  %91 = vmatpush2.msra.mxu0 0.0
  %92 = vmatprep.subr.mxu0 0.0
  %93 = vmatpush2.msra.mxu0 0.0
  %94 = vmatprep.subr.mxu0 0.0
  %95 = vmatpush2.msra.mxu0 0.0
  %96 = vmatprep.subr.mxu0 0.0
  %97 = vmatpush2.msra.mxu0 0.0
  %98 = vmatprep.subr.mxu0 0.0
  %99 = vmatpush2.msra.mxu0 0.0
  %100 = vmatprep.subr.mxu0 0.0
  %101 = vmatpush2.msra.mxu0 0.0
  %102 = vmatprep.subr.mxu0 0.0
  %103 = vmatpush2.msra.mxu0 0.0
  %104 = vmatprep.subr.mxu0 0.0
  %105 = vmatpush2.msra.mxu0 0.0
  %106 = vmatprep.subr.mxu0 0.0
  %107 = vmatpush2.msra.mxu0 0.0
  %108 = vmatprep.subr.mxu0 0.0
  %109 = vmatpush2.msra.mxu0 0.0
  %110 = vmatprep.subr.mxu0 0.0
  %111 = vmatpush2.msra.mxu0 0.0
  %112 = vmatprep.subr.mxu0 0.0
  %113 = vmatpush2.msra.mxu0 0.0
  %114 = vmatprep.subr.mxu0 0.0
  %115 = vmatpush2.msra.mxu0 0.0
  %116 = vmatprep.subr.mxu0 0.0
  %117 = vmatpush2.msra.mxu0 0.0
  %118 = vmatprep.subr.mxu0 0.0
  %119 = vmatpush2.msra.mxu0 0.0
  %120 = vmatprep.mubr.f32.mxu0 0.0
  %121 = vmatmul.mubr.f32.gmra.mxu0 %v51
  %v122 = vpop.f32.mrf.mxu0
  %v123 = vadd.f32 %v47, %v122
  %v124 = vpop.f32.mrf.mxu0
  %125 = vmatprep.mubr.f32.mxu0 0.0
  %126 = vmatmul.mubr.f32.gmra.mxu0 %v54
  %v127 = vpop.f32.mrf.mxu0
  %v128 = vadd.f32 %v47, %v127
  %v129 = vpop.f32.mrf.mxu0
  %130 = vdwg.mxu0
  %v131 = vld [vmem:[%s3] sm:$0xff]
  %v132 = vld [vmem:[%s3 + $0x8] sm:$0xff]
  %v133 = vld [vmem:[%s3 + $0x10] sm:$0xff]
  %v134 = vld [vmem:[%s3 + $0x18] sm:$0xff]
  %v135 = vld [vmem:[%s3 + $0x20] sm:$0xff]
  %v136 = vld [vmem:[%s3 + $0x28] sm:$0xff]
  %v137 = vld [vmem:[%s3 + $0x30] sm:$0xff]
  %v138 = vld [vmem:[%s3 + $0x38] sm:$0xff]
  %v139 = vld [vmem:[%s4] sm:$0x1]
  %v141 = vlaneseq
  %v142 = vshrl.u32 %v141, 7
  %v143 = vsub.s32 0, %v142
  %v144 = vrot.slane %v139, %v143
  %146 = vmatprep.subr.mxu0 0.0
  %147 = vmatpush1.msra.mxu0 0.0
  %148 = vmatprep.subr.mxu0 0.0
  %149 = vmatpush1.msra.mxu0 0.0
  %150 = vmatprep.subr.mxu0 0.0
  %151 = vmatpush1.msra.mxu0 0.0
  %152 = vmatprep.subr.mxu0 0.0
  %153 = vmatpush1.msra.mxu0 0.0
  %154 = vmatprep.subr.mxu0 0.0
  %155 = vmatpush1.msra.mxu0 0.0
  %156 = vmatprep.subr.mxu0 0.0
  %157 = vmatpush1.msra.mxu0 0.0
  %158 = vmatprep.subr.mxu0 0.0
  %159 = vmatpush1.msra.mxu0 0.0
  %160 = vmatprep.subr.mxu0 0.0
  %161 = vmatpush1.msra.mxu0 0.0
  %162 = vmatprep.subr.mxu0 0.0
  %163 = vmatpush1.msra.mxu0 %v138
  %164 = vmatprep.subr.mxu0 0.0
  %165 = vmatpush1.msra.mxu0 %v137
  %166 = vmatprep.subr.mxu0 0.0
  %167 = vmatpush1.msra.mxu0 %v136
  %168 = vmatprep.subr.mxu0 0.0
  %169 = vmatpush1.msra.mxu0 %v135
  %170 = vmatprep.subr.mxu0 0.0
  %171 = vmatpush1.msra.mxu0 %v134
  %172 = vmatprep.subr.mxu0 0.0
  %173 = vmatpush1.msra.mxu0 %v133
  %174 = vmatprep.subr.mxu0 0.0
  %175 = vmatpush1.msra.mxu0 %v132
  %176 = vmatprep.subr.mxu0 0.0
  %177 = vmatpush1.msra.mxu0 %v131
  %178 = vmatprep.subr.mxu0 0.0
  %179 = vmatpush2.msra.mxu0 0.0
  %180 = vmatprep.subr.mxu0 0.0
  %181 = vmatpush2.msra.mxu0 0.0
  %182 = vmatprep.subr.mxu0 0.0
  %183 = vmatpush2.msra.mxu0 0.0
  %184 = vmatprep.subr.mxu0 0.0
  %185 = vmatpush2.msra.mxu0 0.0
  %186 = vmatprep.subr.mxu0 0.0
  %187 = vmatpush2.msra.mxu0 0.0
  %188 = vmatprep.subr.mxu0 0.0
  %189 = vmatpush2.msra.mxu0 0.0
  %190 = vmatprep.subr.mxu0 0.0
  %191 = vmatpush2.msra.mxu0 0.0
  %192 = vmatprep.subr.mxu0 0.0
  %193 = vmatpush2.msra.mxu0 0.0
  %194 = vmatprep.subr.mxu0 0.0
  %195 = vmatpush2.msra.mxu0 0.0
  %196 = vmatprep.subr.mxu0 0.0
  %197 = vmatpush2.msra.mxu0 0.0
  %198 = vmatprep.subr.mxu0 0.0
  %199 = vmatpush2.msra.mxu0 0.0
  %200 = vmatprep.subr.mxu0 0.0
  %201 = vmatpush2.msra.mxu0 0.0
  %202 = vmatprep.subr.mxu0 0.0
  %203 = vmatpush2.msra.mxu0 0.0
  %204 = vmatprep.subr.mxu0 0.0
  %205 = vmatpush2.msra.mxu0 0.0
  %206 = vmatprep.subr.mxu0 0.0
  %207 = vmatpush2.msra.mxu0 0.0
  %208 = vmatprep.subr.mxu0 0.0
  %209 = vmatpush2.msra.mxu0 0.0
  %210 = vmatprep.mubr.f32.mxu0 0.0
  %211 = vmatmul.mubr.f32.gmra.mxu0 %v51
  %v212 = vpop.f32.mrf.mxu0
  %v213 = vadd.f32 %v144, %v212
  %v214 = vpop.f32.mrf.mxu0
  %215 = vmatprep.mubr.f32.mxu0 0.0
  %216 = vmatmul.mubr.f32.gmra.mxu0 %v54
  %v217 = vpop.f32.mrf.mxu0
  %v218 = vadd.f32 %v144, %v217
  %v219 = vpop.f32.mrf.mxu0
  %220 = vdwg.mxu0
  %vm221 = vcmask 130048
  %v222 = vsel %vm221, %v123, -inf
  %v223 = vrot.slane %v222, 4
  %v224 = vmax.f32 %v222, %v223
  %v225 = vrot.slane %v224, 2
  %v226 = vmax.f32 %v224, %v225
  %v227 = vrot.slane %v226, 1
  %v228 = vmax.f32 %v226, %v227
  %v229 = vsel %vm221, %v128, -inf
  %v230 = vrot.slane %v229, 4
  %v231 = vmax.f32 %v229, %v230
  %v232 = vrot.slane %v231, 2
  %v233 = vmax.f32 %v231, %v232
  %v234 = vrot.slane %v233, 1
  %v235 = vmax.f32 %v233, %v234
  %v236 = vsub.f32 %v123, %v228
  %v237 = vsub.f32 %v128, %v235
  %v238 = vmul.f32 %v236, 1.442695
  %v239 = vpow.pop %v238
  %v240 = vmul.f32 %v237, 1.442695
  %v241 = vpow.pop %v240
  %v242 = vsel %vm221, %v239, 0.0
  %v243 = vrot.slane %v242, 4
  %v244 = vadd.f32 %v242, %v243
  %v245 = vrot.slane %v244, 2
  %v246 = vadd.f32 %v244, %v245
  %v247 = vrot.slane %v246, 1
  %v248 = vadd.f32 %v246, %v247
  %v249 = vsel %vm221, %v241, 0.0
  %v250 = vrot.slane %v249, 4
  %v251 = vadd.f32 %v249, %v250
  %v252 = vrot.slane %v251, 2
  %v253 = vadd.f32 %v251, %v252
  %v254 = vrot.slane %v253, 1
  %v255 = vadd.f32 %v253, %v254
  %v256 = vrcp.pop %v248
  %v257 = vrcp.pop %v255
  %v258 = vmul.f32 %v239, %v256
  %v259 = vmul.f32 %v241, %v257
  %v260 = vld [vmem:[%s5] sm:$0xff]
  %v261 = vld [vmem:[%s5 + $0x8] sm:$0xff]
  %v263 = vsel %vm221, %v258, 0
  %v266 = vsel %vm221, %v259, 0
  %268 = vmatprep.subr.mxu0 0.0
  %269 = vmatpush1.msra.mxu0 0.0
  %270 = vmatprep.subr.mxu0 0.0
  %271 = vmatpush1.msra.mxu0 0.0
  %272 = vmatprep.subr.mxu0 0.0
  %273 = vmatpush1.msra.mxu0 0.0
  %274 = vmatprep.subr.mxu0 0.0
  %275 = vmatpush1.msra.mxu0 0.0
  %276 = vmatprep.subr.mxu0 0.0
  %277 = vmatpush1.msra.mxu0 0.0
  %278 = vmatprep.subr.mxu0 0.0
  %279 = vmatpush1.msra.mxu0 0.0
  %280 = vmatprep.subr.mxu0 0.0
  %281 = vmatpush1.msra.mxu0 0.0
  %282 = vmatprep.subr.mxu0 0.0
  %283 = vmatpush1.msra.mxu0 0.0
  %284 = vmatprep.subr.mxu0 0.0
  %285 = vmatpush1.msra.mxu0 0.0
  %286 = vmatprep.subr.mxu0 0.0
  %287 = vmatpush1.msra.mxu0 0.0
  %288 = vmatprep.subr.mxu0 0.0
  %289 = vmatpush1.msra.mxu0 0.0
  %290 = vmatprep.subr.mxu0 0.0
  %291 = vmatpush1.msra.mxu0 0.0
  %292 = vmatprep.subr.mxu0 0.0
  %293 = vmatpush1.msra.mxu0 0.0
  %294 = vmatprep.subr.mxu0 0.0
  %295 = vmatpush1.msra.mxu0 0.0
  %296 = vmatprep.subr.mxu0 0.0
  %297 = vmatpush1.msra.mxu0 %v261
  %298 = vmatprep.subr.mxu0 0.0
  %299 = vmatpush1.msra.mxu0 %v260
  %300 = vmatprep.subr.mxu0 0.0
  %301 = vmatpush2.msra.mxu0 0.0
  %302 = vmatprep.subr.mxu0 0.0
  %303 = vmatpush2.msra.mxu0 0.0
  %304 = vmatprep.subr.mxu0 0.0
  %305 = vmatpush2.msra.mxu0 0.0
  %306 = vmatprep.subr.mxu0 0.0
  %307 = vmatpush2.msra.mxu0 0.0
  %308 = vmatprep.subr.mxu0 0.0
  %309 = vmatpush2.msra.mxu0 0.0
  %310 = vmatprep.subr.mxu0 0.0
  %311 = vmatpush2.msra.mxu0 0.0
  %312 = vmatprep.subr.mxu0 0.0
  %313 = vmatpush2.msra.mxu0 0.0
  %314 = vmatprep.subr.mxu0 0.0
  %315 = vmatpush2.msra.mxu0 0.0
  %316 = vmatprep.subr.mxu0 0.0
  %317 = vmatpush2.msra.mxu0 0.0
  %318 = vmatprep.subr.mxu0 0.0
  %319 = vmatpush2.msra.mxu0 0.0
  %320 = vmatprep.subr.mxu0 0.0
  %321 = vmatpush2.msra.mxu0 0.0
  %322 = vmatprep.subr.mxu0 0.0
  %323 = vmatpush2.msra.mxu0 0.0
  %324 = vmatprep.subr.mxu0 0.0
  %325 = vmatpush2.msra.mxu0 0.0
  %326 = vmatprep.subr.mxu0 0.0
  %327 = vmatpush2.msra.mxu0 0.0
  %328 = vmatprep.subr.mxu0 0.0
  %329 = vmatpush2.msra.mxu0 0.0
  %330 = vmatprep.subr.mxu0 0.0
  %331 = vmatpush2.msra.mxu0 0.0
  %332 = vmatprep.mubr.f32.mxu0 0.0
  %333 = vmatmul.mubr.f32.gmra.mxu0 %v263
  %v334 = vpop.f32.mrf.mxu0
  %v335 = vadd.f32 0.0, %v334
  %v336 = vpop.f32.mrf.mxu0
  %337 = vmatprep.mubr.f32.mxu0 0.0
  %338 = vmatmul.mubr.f32.gmra.mxu0 %v266
  %v339 = vpop.f32.mrf.mxu0
  %v340 = vadd.f32 0.0, %v339
  %v341 = vpop.f32.mrf.mxu0
  %342 = vdwg.mxu0
  %345 = vrot.lane.b32.xlu0 %v213, 64
  %v346 = vpop.permute.xlu0 %345
  %347 = vrot.lane.b32.xlu0 %v218, 64
  %v348 = vpop.permute.xlu0 %347
  %v351 = vsel %vm49, %v213, %v346
  %v352 = vsel %vm49, %v218, %v348
  %v353 = vmul.f32 %v335, %v351
  %v354 = vmul.f32 %v340, %v352
  %v355 = vld [vmem:[%s6] sm:$0x3]
  %v357 = vsel %vm221, %v355, 0
  %359 = vmatprep.subr.mxu0 0.0
  %360 = vmatpush1.msra.mxu0 0.0
  %361 = vmatprep.subr.mxu0 0.0
  %362 = vmatpush1.msra.mxu0 0.0
  %363 = vmatprep.subr.mxu0 0.0
  %364 = vmatpush1.msra.mxu0 0.0
  %365 = vmatprep.subr.mxu0 0.0
  %366 = vmatpush1.msra.mxu0 0.0
  %367 = vmatprep.subr.mxu0 0.0
  %368 = vmatpush1.msra.mxu0 0.0
  %369 = vmatprep.subr.mxu0 0.0
  %370 = vmatpush1.msra.mxu0 0.0
  %371 = vmatprep.subr.mxu0 0.0
  %372 = vmatpush1.msra.mxu0 0.0
  %373 = vmatprep.subr.mxu0 0.0
  %374 = vmatpush1.msra.mxu0 0.0
  %375 = vmatprep.subr.mxu0 0.0
  %376 = vmatpush1.msra.mxu0 0.0
  %377 = vmatprep.subr.mxu0 0.0
  %378 = vmatpush1.msra.mxu0 0.0
  %379 = vmatprep.subr.mxu0 0.0
  %380 = vmatpush1.msra.mxu0 0.0
  %381 = vmatprep.subr.mxu0 0.0
  %382 = vmatpush1.msra.mxu0 0.0
  %383 = vmatprep.subr.mxu0 0.0
  %384 = vmatpush1.msra.mxu0 0.0
  %385 = vmatprep.subr.mxu0 0.0
  %386 = vmatpush1.msra.mxu0 0.0
  %387 = vmatprep.subr.mxu0 0.0
  %388 = vmatpush1.msra.mxu0 %v354
  %389 = vmatprep.subr.mxu0 0.0
  %390 = vmatpush1.msra.mxu0 %v353
  %391 = vmatprep.subr.mxu0 0.0
  %392 = vmatpush2.msra.mxu0 0.0
  %393 = vmatprep.subr.mxu0 0.0
  %394 = vmatpush2.msra.mxu0 0.0
  %395 = vmatprep.subr.mxu0 0.0
  %396 = vmatpush2.msra.mxu0 0.0
  %397 = vmatprep.subr.mxu0 0.0
  %398 = vmatpush2.msra.mxu0 0.0
  %399 = vmatprep.subr.mxu0 0.0
  %400 = vmatpush2.msra.mxu0 0.0
  %401 = vmatprep.subr.mxu0 0.0
  %402 = vmatpush2.msra.mxu0 0.0
  %403 = vmatprep.subr.mxu0 0.0
  %404 = vmatpush2.msra.mxu0 0.0
  %405 = vmatprep.subr.mxu0 0.0
  %406 = vmatpush2.msra.mxu0 0.0
  %407 = vmatprep.subr.mxu0 0.0
  %408 = vmatpush2.msra.mxu0 0.0
  %409 = vmatprep.subr.mxu0 0.0
  %410 = vmatpush2.msra.mxu0 0.0
  %411 = vmatprep.subr.mxu0 0.0
  %412 = vmatpush2.msra.mxu0 0.0
  %413 = vmatprep.subr.mxu0 0.0
  %414 = vmatpush2.msra.mxu0 0.0
  %415 = vmatprep.subr.mxu0 0.0
  %416 = vmatpush2.msra.mxu0 0.0
  %417 = vmatprep.subr.mxu0 0.0
  %418 = vmatpush2.msra.mxu0 0.0
  %419 = vmatprep.subr.mxu0 0.0
  %420 = vmatpush2.msra.mxu0 0.0
  %421 = vmatprep.subr.mxu0 0.0
  %422 = vmatpush2.msra.mxu0 0.0
  %423 = vmatprep.mubr.f32.mxu0 0.0
  %424 = vmatmul.mubr.f32.gmra.mxu0 %v357
  %v425 = vpop.f32.mrf.mxu0
  %v426 = vadd.f32 0.0, %v425
  %v427 = vpop.f32.mrf.mxu0
  %428 = vdwg.mxu0
  %v429 = vld [vmem:[%s7] sm:$0xff]
  %v430 = vld [vmem:[%s7 + $0x8] sm:$0xff]
  %v431 = vld [vmem:[%s7 + $0x10] sm:$0xff]
  %v432 = vld [vmem:[%s7 + $0x18] sm:$0xff]
  %v433 = vld [vmem:[%s7 + $0x20] sm:$0xff]
  %v434 = vld [vmem:[%s7 + $0x28] sm:$0xff]
  %v435 = vld [vmem:[%s7 + $0x30] sm:$0xff]
  %v436 = vld [vmem:[%s7 + $0x38] sm:$0xff]
  %v437 = vld [vmem:[%s7 + $0x40] sm:$0xff]
  %v438 = vld [vmem:[%s7 + $0x48] sm:$0xff]
  %v439 = vld [vmem:[%s7 + $0x50] sm:$0xff]
  %v440 = vld [vmem:[%s7 + $0x58] sm:$0xff]
  %v441 = vld [vmem:[%s7 + $0x60] sm:$0xff]
  %v442 = vld [vmem:[%s7 + $0x68] sm:$0xff]
  %v443 = vld [vmem:[%s7 + $0x70] sm:$0xff]
  %v444 = vld [vmem:[%s7 + $0x78] sm:$0xff]
  %v445 = vld [vmem:[%s8] sm:$0x1]
  %v447 = vlaneseq
  %v448 = vshrl.u32 %v447, 7
  %v449 = vsub.s32 0, %v448
  %v450 = vrot.slane %v445, %v449
  %452 = vmatprep.subr.mxu0 0.0
  %453 = vmatpush1.msra.mxu0 %v444
  %454 = vmatprep.subr.mxu0 0.0
  %455 = vmatpush1.msra.mxu0 %v443
  %456 = vmatprep.subr.mxu0 0.0
  %457 = vmatpush1.msra.mxu0 %v442
  %458 = vmatprep.subr.mxu0 0.0
  %459 = vmatpush1.msra.mxu0 %v441
  %460 = vmatprep.subr.mxu0 0.0
  %461 = vmatpush1.msra.mxu0 %v440
  %462 = vmatprep.subr.mxu0 0.0
  %463 = vmatpush1.msra.mxu0 %v439
  %464 = vmatprep.subr.mxu0 0.0
  %465 = vmatpush1.msra.mxu0 %v438
  %466 = vmatprep.subr.mxu0 0.0
  %467 = vmatpush1.msra.mxu0 %v437
  %468 = vmatprep.subr.mxu0 0.0
  %469 = vmatpush1.msra.mxu0 %v436
  %470 = vmatprep.subr.mxu0 0.0
  %471 = vmatpush1.msra.mxu0 %v435
  %472 = vmatprep.subr.mxu0 0.0
  %473 = vmatpush1.msra.mxu0 %v434
  %474 = vmatprep.subr.mxu0 0.0
  %475 = vmatpush1.msra.mxu0 %v433
  %476 = vmatprep.subr.mxu0 0.0
  %477 = vmatpush1.msra.mxu0 %v432
  %478 = vmatprep.subr.mxu0 0.0
  %479 = vmatpush1.msra.mxu0 %v431
  %480 = vmatprep.subr.mxu0 0.0
  %481 = vmatpush1.msra.mxu0 %v430
  %482 = vmatprep.subr.mxu0 0.0
  %483 = vmatpush1.msra.mxu0 %v429
  %484 = vmatprep.subr.mxu0 0.0
  %485 = vmatpush2.msra.mxu0 0.0
  %486 = vmatprep.subr.mxu0 0.0
  %487 = vmatpush2.msra.mxu0 0.0
  %488 = vmatprep.subr.mxu0 0.0
  %489 = vmatpush2.msra.mxu0 0.0
  %490 = vmatprep.subr.mxu0 0.0
  %491 = vmatpush2.msra.mxu0 0.0
  %492 = vmatprep.subr.mxu0 0.0
  %493 = vmatpush2.msra.mxu0 0.0
  %494 = vmatprep.subr.mxu0 0.0
  %495 = vmatpush2.msra.mxu0 0.0
  %496 = vmatprep.subr.mxu0 0.0
  %497 = vmatpush2.msra.mxu0 0.0
  %498 = vmatprep.subr.mxu0 0.0
  %499 = vmatpush2.msra.mxu0 0.0
  %500 = vmatprep.subr.mxu0 0.0
  %501 = vmatpush2.msra.mxu0 0.0
  %502 = vmatprep.subr.mxu0 0.0
  %503 = vmatpush2.msra.mxu0 0.0
  %504 = vmatprep.subr.mxu0 0.0
  %505 = vmatpush2.msra.mxu0 0.0
  %506 = vmatprep.subr.mxu0 0.0
  %507 = vmatpush2.msra.mxu0 0.0
  %508 = vmatprep.subr.mxu0 0.0
  %509 = vmatpush2.msra.mxu0 0.0
  %510 = vmatprep.subr.mxu0 0.0
  %511 = vmatpush2.msra.mxu0 0.0
  %512 = vmatprep.subr.mxu0 0.0
  %513 = vmatpush2.msra.mxu0 0.0
  %514 = vmatprep.subr.mxu0 0.0
  %515 = vmatpush2.msra.mxu0 0.0
  %516 = vmatprep.mubr.f32.mxu0 0.0
  %517 = vmatmul.mubr.f32.gmra.mxu0 %v426
  %v518 = vpop.f32.mrf.mxu0
  %v519 = vadd.f32 %v450, %v518
  %v520 = vpop.f32.mrf.mxu0
  %521 = vdwg.mxu0
  %522 = vst [vmem:[%s9] sm:$0x3] %v519
  // Predicated region
  $region38: #{action_decoder_forward.1} parent=0 // pred_check
    _
  $region39: #{action_decoder_forward.1} parent=0 // pred_check_branch
    %524 = sbr.rel (0) target = $region41
  $region40: #{action_decoder_forward.1} parent=0 // pred_region
    _
  $region41: #{action_decoder_forward.1} parent=0 // pred_fallthru
    _
  // Predicated region
  $region42: #{action_decoder_forward.1} parent=0 // pred_check
    _
  $region43: #{action_decoder_forward.1} parent=0 // pred_check_branch
    %526 = sbr.rel (0) target = $region45
  $region44: #{action_decoder_forward.1} parent=0 // pred_region
    _
  $region45: #{action_decoder_forward.1} parent=0 // pred_fallthru
    _

</llo_original>
